<compile_context>
chip_gen: v5e
topology: v5e:2x2
jax: 0.10.0
libtpu: 0.0.40
codegen_flags: <defaults>
</compile_context>

<pallas_src>
import jax
import jax.numpy as jnp
from jax import lax
from jax.experimental import pallas as pl
from jax.experimental.pallas import tpu as pltpu


def _round_up(v, m):
    return ((v + m - 1) // m) * m


def cnn_kernel(xim_ref, w1_ref, b1_ref, w2_ref, b2_ref,
               wf1_ref, bf1_ref, wf2_ref, bf2_ref, o_ref, flat_ref):
    # xim_ref block: (Bblk, T, 3F) im2col'd input, channel-last, zero halos.
    Bblk, T, F3 = xim_ref.shape
    Thalf = T // 2
    M = Bblk * T
    cdt = w1_ref.dtype                           # MXU compute dtype (f32 or bf16)

    xim = xim_ref[...].reshape(M, F3)            # time-major rows: row = b*T + t

    # conv1 ('same', k=3) as a single K=3F matmul + bias + ReLU (f32 accumulate).
    h1 = jnp.dot(xim, w1_ref[...], preferred_element_type=jnp.float32)
    h1 = jnp.maximum(h1 + b1_ref[...], 0.0)                        # (M, 64) f32

    # conv2 ('same', k=3): sublane rolls + hoisted per-sample boundary masks.
    #   out[t] = b + w[0]@h1[t-1] + w[1]@h1[t] + w[2]@h1[t+1]
    # (M,1) masks broadcast in jnp.where; they kill both the roll wrap-around
    # and any cross-sample halo leakage inside the batched block.
    t_idx = lax.broadcasted_iota(jnp.int32, (M, 1), 0) % T
    not_first = t_idx != 0
    not_last = t_idx != (T - 1)
    h1_prev = jnp.where(not_first, pltpu.roll(h1, shift=1, axis=0), 0.0)
    h1_next = jnp.where(not_last, pltpu.roll(h1, shift=M - 1, axis=0), 0.0)
    acc = jnp.dot(h1_prev.astype(cdt), w2_ref[0], preferred_element_type=jnp.float32)
    acc = acc + jnp.dot(h1.astype(cdt), w2_ref[1], preferred_element_type=jnp.float32)
    acc = acc + jnp.dot(h1_next.astype(cdt), w2_ref[2], preferred_element_type=jnp.float32)
    h2 = jnp.maximum(acc + b2_ref[...], 0.0)                       # (M, 64) f32

    # Dropout(p=0.2): identity at inference (eval) time.
    # TODO(synk): training-mode stochastic dropout (pltpu.prng_*) not implemented.

    # MaxPool1d(k=2, s=2) + flatten, assembled in torch flatten order (index =
    # t'*64 + c, matched by the wf1 permutation in the wrapper). Two pooled
    # time-steps are packed per store so every write is a full 128-lane-aligned
    # chunk (no masked partial stores); an odd Thalf keeps a single 64-lane tail.
    h2_3d = h2.reshape(Bblk, T, 64)
    th = 0
    while th + 1 < Thalf:                                          # static unroll
        p0 = jnp.maximum(h2_3d[:, 2 * th, :], h2_3d[:, 2 * th + 1, :])
        p1 = jnp.maximum(h2_3d[:, 2 * th + 2, :], h2_3d[:, 2 * th + 3, :])
        flat_ref[:, th * 64:(th + 2) * 64] = (
            jnp.concatenate([p0, p1], axis=-1).astype(flat_ref.dtype))
        th += 2
    if th < Thalf:
        flat_ref[:, th * 64:(th + 1) * 64] = jnp.maximum(
            h2_3d[:, 2 * th, :], h2_3d[:, 2 * th + 1, :]).astype(flat_ref.dtype)

    # fc1: one (Bblk, Thalf*64) x (Thalf*64, H_PAD) matmul, bias + ReLU in f32.
    z1 = jnp.dot(flat_ref[...], wf1_ref[...],
                 preferred_element_type=jnp.float32) + bf1_ref[...]
    z1 = jnp.maximum(z1, 0.0)                                      # (Bblk, H_PAD)

    # fc2 (output lane-padded to 128 -> lane-dense store).
    z2 = jnp.dot(z1.astype(cdt), wf2_ref[...],
                 preferred_element_type=jnp.float32) + bf2_ref[...]
    o_ref[...] = z2.astype(o_ref.dtype)                            # (Bblk, N_PAD)


def cnn_forward(x, params, *, compute_dtype=jnp.float32):
    """x: (B, n_timesteps, n_features) float32; params in torch layouts.

    compute_dtype: jnp.float32 (exact) or jnp.bfloat16 (v6e/v7x MXU fast path;
    accumulation stays f32, elementwise ReLU/max/where stay f32)."""
    B, T, F = x.shape
    assert T % 2 == 0, "MaxPool1d(2) + fc1 sizing assumes even n_timesteps"
    Thalf = T // 2
    w1, b1, w2, b2, wf1, bf1, wf2, bf2 = params
    n_hidden = wf1.shape[0]                      # 100
    n_out = wf2.shape[0]

    # Lane-pad FC dims to multiples of 128 (lane-dense loads/stores).
    H_PAD = _round_up(n_hidden, 128)
    N_PAD = _round_up(n_out, 128)

    # Batch block: >=128 rows per block for the FC matmuls when the batch allows,
    # keeping >=2 blocks for large batches so v7x's two TensorCores both get
    # work; tiny batches use a single minimally padded block (multiple of 8).
    if B > 256:
        bblk = 128
    elif B > 128:
        bblk = _round_up(pl.cdiv(B, 2), 8)       # exactly 2 blocks
    else:
        bblk = _round_up(max(B, 1), 8)           # 1 block, minimal padding
    num_blocks = pl.cdiv(B, bblk)
    B_pad = num_blocks * bblk

    # im2col for conv1 (built once by XLA): (B, T, 3F) = [x[t-1] | x[t] | x[t+1]],
    # zero halos at t=0 / t=T-1 reproduce Conv1d padding=1.
    x_prev = jnp.pad(x[:, :-1, :], ((0, 0), (1, 0), (0, 0)))
    x_next = jnp.pad(x[:, 1:, :], ((0, 0), (0, 1), (0, 0)))
    xim = jnp.concatenate([x_prev, x, x_next], axis=-1)            # (B, T, 3F)
    if B_pad != B:
        xim = jnp.pad(xim, ((0, B_pad - B), (0, 0), (0, 0)))
    xim = xim.astype(compute_dtype)

    # Rearrange torch-layout weights into kernel (MXU-friendly) layouts.
    # conv1: torch (64, F, 3) -> (3F, 64); row = k*F + cin matches xim columns.
    w1r = jnp.transpose(w1, (2, 1, 0)).reshape(3 * F, 64).astype(compute_dtype)
    w2r = jnp.transpose(w2, (2, 1, 0)).astype(compute_dtype)       # (3, 64, 64)
    b1r = b1.reshape(1, 64).astype(jnp.float32)
    b2r = b2.reshape(1, 64).astype(jnp.float32)
    # torch flatten order: flat index = c*Thalf + t' ; kernel uses t'*64 + c.
    wf1r = jnp.transpose(wf1.reshape(n_hidden, 64, Thalf), (2, 1, 0))
    wf1r = wf1r.reshape(Thalf * 64, n_hidden)                      # row = t'*64 + c
    wf1r = jnp.pad(wf1r, ((0, 0), (0, H_PAD - n_hidden))).astype(compute_dtype)
    bf1r = jnp.pad(bf1.reshape(1, n_hidden),
                   ((0, 0), (0, H_PAD - n_hidden))).astype(jnp.float32)
    wf2r = jnp.pad(jnp.transpose(wf2, (1, 0)),
                   ((0, H_PAD - n_hidden), (0, N_PAD - n_out))).astype(compute_dtype)
    bf2r = jnp.pad(bf2.reshape(1, n_out),
                   ((0, 0), (0, N_PAD - n_out))).astype(jnp.float32)

    out = pl.pallas_call(
        cnn_kernel,
        out_shape=jax.ShapeDtypeStruct((B_pad, N_PAD), jnp.float32),
        grid_spec=pltpu.PrefetchScalarGridSpec(
            num_scalar_prefetch=0,
            grid=(num_blocks,),
            in_specs=[
                pl.BlockSpec((bblk, T, 3 * F), lambda b: (b, 0, 0)),   # im2col x
                pl.BlockSpec((3 * F, 64), lambda b: (0, 0)),           # conv1 w
                pl.BlockSpec((1, 64), lambda b: (0, 0)),               # conv1 b
                pl.BlockSpec((3, 64, 64), lambda b: (0, 0, 0)),        # conv2 w
                pl.BlockSpec((1, 64), lambda b: (0, 0)),               # conv2 b
                pl.BlockSpec((Thalf * 64, H_PAD), lambda b: (0, 0)),   # fc1 w
                pl.BlockSpec((1, H_PAD), lambda b: (0, 0)),            # fc1 b
                pl.BlockSpec((H_PAD, N_PAD), lambda b: (0, 0)),        # fc2 w
                pl.BlockSpec((1, N_PAD), lambda b: (0, 0)),            # fc2 b
            ],
            out_specs=pl.BlockSpec((bblk, N_PAD), lambda b: (b, 0)),
            scratch_shapes=[pltpu.VMEM((bblk, Thalf * 64), compute_dtype)],
        ),
        compiler_params=pltpu.CompilerParams(
            dimension_semantics=("parallel",)),  # batch blocks are independent
    )(xim, w1r, b1r, w2r, b2r, wf1r, bf1r, wf2r, bf2r)
    return out[:B, :n_out]


def reference_forward(x, params):
    """Pure-JAX reference matching the PyTorch forward (eval mode)."""
    w1, b1, w2, b2, wf1, bf1, wf2, bf2 = params
    B, T, F = x.shape
    xc = jnp.transpose(x, (0, 2, 1))                          # NCW, like torch

    def conv_relu(xin, w, b):
        y = lax.conv_general_dilated(xin, w, window_strides=(1,),
                                     padding=[(1, 1)],
                                     dimension_numbers=('NCH', 'OIH', 'NCH'))
        return jnp.maximum(y + b[None, :, None], 0.0)

    h = conv_relu(xc, w1, b1)
    h = conv_relu(h, w2, b2)
    Thalf = T // 2
    h = jnp.max(h.reshape(B, 64, Thalf, 2), axis=-1)          # MaxPool1d(2)
    flat = h.reshape(B, -1)                                   # view(B, -1)
    z1 = jnp.maximum(flat @ wf1.T + bf1, 0.0)
    return z1 @ wf2.T + bf2


if __name__ == "__main__":
    B, T, F, n_out = 2, 16, 8, 5                              # batch, timesteps, features, outputs
    key = jax.random.PRNGKey(0)
    ks = jax.random.split(key, 9)
    params = (
        0.1 * jax.random.normal(ks[0], (64, F, 3), jnp.float32),            # conv1.weight
        0.1 * jax.random.normal(ks[1], (64,), jnp.float32),                 # conv1.bias
        0.1 * jax.random.normal(ks[2], (64, 64, 3), jnp.float32),           # conv2.weight
        0.1 * jax.random.normal(ks[3], (64,), jnp.float32),                 # conv2.bias
        0.1 * jax.random.normal(ks[4], (100, 64 * (T // 2)), jnp.float32),  # fc1.weight
        0.1 * jax.random.normal(ks[5], (100,), jnp.float32),                # fc1.bias
        0.1 * jax.random.normal(ks[6], (n_out, 100), jnp.float32),          # fc2.weight
        0.1 * jax.random.normal(ks[7], (n_out,), jnp.float32),              # fc2.bias
    )
    x = jax.random.normal(ks[8], (B, T, F), jnp.float32)

    ref = jax.block_until_ready(reference_forward(x, params))

    # Exact f32 path.
    out = jax.block_until_ready(cnn_forward(x, params))
    assert out.shape == (B, n_out)
    assert jnp.allclose(out, ref, atol=1e-4, rtol=1e-4), (out, ref)

    # bf16 MXU fast path (v6e/v7x): bf16 matmul inputs, f32 accumulation.
    out_bf16 = jax.block_until_ready(
        cnn_forward(x, params, compute_dtype=jnp.bfloat16))
    assert out_bf16.shape == (B, n_out)
    assert jnp.allclose(out_bf16, ref, atol=1e-1, rtol=1e-1), (out_bf16, ref)

    print("KERNEL_OK")
</pallas_src>

<mosaic_0001>
module attributes {stable_mosaic.version = 11 : i64} {
  func.func @cnn_kernel(%arg0: i32, %arg1: memref<8x16x24xf32, #tpu.memory_space<vmem>>, %arg2: memref<24x64xf32, #tpu.memory_space<vmem>>, %arg3: memref<1x64xf32, #tpu.memory_space<vmem>>, %arg4: memref<3x64x64xf32, #tpu.memory_space<vmem>>, %arg5: memref<1x64xf32, #tpu.memory_space<vmem>>, %arg6: memref<512x128xf32, #tpu.memory_space<vmem>>, %arg7: memref<1x128xf32, #tpu.memory_space<vmem>>, %arg8: memref<128x128xf32, #tpu.memory_space<vmem>>, %arg9: memref<1x128xf32, #tpu.memory_space<vmem>>, %arg10: memref<8x128xf32, #tpu.memory_space<vmem>>, %arg11: memref<8x512xf32, #tpu.memory_space<vmem>>) attributes {dimension_semantics = [#tpu.dimension_semantics<parallel>], iteration_bounds = array<i64: 1>, scalar_prefetch = 0 : i64, scratch_operands = 1 : i64, tpu.core_type = #tpu.core_type<tc>, window_params = [{transform_indices = @transform_0, window_bounds = array<i64: 8, 16, 24>}, {pipeline_mode = #tpu.pipeline_mode<synchronous>, transform_indices = @transform_1, window_bounds = array<i64: 24, 64>}, {pipeline_mode = #tpu.pipeline_mode<synchronous>, transform_indices = @transform_2, window_bounds = array<i64: 1, 64>}, {pipeline_mode = #tpu.pipeline_mode<synchronous>, transform_indices = @transform_3, window_bounds = array<i64: 3, 64, 64>}, {pipeline_mode = #tpu.pipeline_mode<synchronous>, transform_indices = @transform_4, window_bounds = array<i64: 1, 64>}, {pipeline_mode = #tpu.pipeline_mode<synchronous>, transform_indices = @transform_5, window_bounds = array<i64: 512, 128>}, {pipeline_mode = #tpu.pipeline_mode<synchronous>, transform_indices = @transform_6, window_bounds = array<i64: 1, 128>}, {pipeline_mode = #tpu.pipeline_mode<synchronous>, transform_indices = @transform_7, window_bounds = array<i64: 128, 128>}, {pipeline_mode = #tpu.pipeline_mode<synchronous>, transform_indices = @transform_8, window_bounds = array<i64: 1, 128>}, {transform_indices = @transform_9, window_bounds = array<i64: 8, 128>}]} {
    %c0 = arith.constant 0 : index
    %c0_0 = arith.constant 0 : index
    %c0_1 = arith.constant 0 : index
    %0 = vector.load %arg1[%c0, %c0_0, %c0_1] : memref<8x16x24xf32, #tpu.memory_space<vmem>>, vector<8x16x24xf32>
    %1 = vector.shape_cast %0 : vector<8x16x24xf32> to vector<128x24xf32>
    %c0_2 = arith.constant 0 : index
    %c0_3 = arith.constant 0 : index
    %2 = vector.load %arg2[%c0_2, %c0_3] : memref<24x64xf32, #tpu.memory_space<vmem>>, vector<24x64xf32>
    %cst = arith.constant dense<0.000000e+00> : vector<128x64xf32>
    %3 = tpu.matmul %1, %2, %cst {dimension_numbers = #tpu.dot_dimension_numbers<[1], [0], [0], [1], [0, 0, 1, 1], [], []>} : vector<128x24xf32>, vector<24x64xf32>, vector<128x64xf32> -> vector<128x64xf32>
    %c0_4 = arith.constant 0 : index
    %c0_5 = arith.constant 0 : index
    %4 = vector.load %arg3[%c0_4, %c0_5] : memref<1x64xf32, #tpu.memory_space<vmem>>, vector<1x64xf32>
    %5 = vector.broadcast %4 : vector<1x64xf32> to vector<128x64xf32>
    %6 = arith.addf %3, %5 : vector<128x64xf32>
    %cst_6 = arith.constant 0.000000e+00 : f32
    %7 = vector.broadcast %cst_6 : f32 to vector<128x64xf32>
    %8 = arith.maximumf %6, %7 : vector<128x64xf32>
    %9 = tpu.iota {dimensions = array<i32: 0>} : vector<128x1xi32>
    %c16_i32 = arith.constant 16 : i32
    %c0_i32 = arith.constant 0 : i32
    %10 = arith.cmpi eq, %c16_i32, %c0_i32 : i32
    %c1_i32 = arith.constant 1 : i32
    %11 = arith.select %10, %c1_i32, %c16_i32 : i32
    %12 = vector.broadcast %11 : i32 to vector<128x1xi32>
    %13 = arith.remsi %9, %12 : vector<128x1xi32>
    %c0_i32_7 = arith.constant 0 : i32
    %14 = vector.broadcast %c0_i32_7 : i32 to vector<128x1xi32>
    %15 = arith.cmpi ne, %13, %14 : vector<128x1xi32>
    %c0_i32_8 = arith.constant 0 : i32
    %16 = vector.broadcast %c0_i32_8 : i32 to vector<128x1xi32>
    %17 = arith.cmpi slt, %13, %16 : vector<128x1xi32>
    %c0_i32_9 = arith.constant 0 : i32
    %18 = arith.cmpi slt, %11, %c0_i32_9 : i32
    %19 = vector.broadcast %18 : i1 to vector<128x1xi1>
    %20 = vector.broadcast %19 : vector<128x1xi1> to vector<128x1xi1>
    %21 = arith.xori %17, %20 : vector<128x1xi1>
    %22 = arith.andi %21, %15 : vector<128x1xi1>
    %23 = vector.broadcast %11 : i32 to vector<128x1xi32>
    %24 = arith.addi %13, %23 : vector<128x1xi32>
    %25 = arith.select %22, %24, %13 : vector<128x1xi1>, vector<128x1xi32>
    %c0_i32_10 = arith.constant 0 : i32
    %26 = vector.broadcast %c0_i32_10 : i32 to vector<128x1xi32>
    %27 = arith.cmpi ne, %25, %26 : vector<128x1xi32>
    %c15_i32 = arith.constant 15 : i32
    %28 = vector.broadcast %c15_i32 : i32 to vector<128x1xi32>
    %29 = arith.cmpi ne, %25, %28 : vector<128x1xi32>
    %c1_i32_11 = arith.constant 1 : i32
    %30 = tpu.dynamic_rotate %8 by %c1_i32_11 dim 0 : vector<128x64xf32>, i32 -> vector<128x64xf32>
    %cst_12 = arith.constant 0.000000e+00 : f32
    %31 = vector.shape_cast %27 : vector<128x1xi1> to vector<128x1xi1>
    %32 = vector.broadcast %31 : vector<128x1xi1> to vector<128x64xi1>
    %33 = vector.broadcast %cst_12 : f32 to vector<128x64xf32>
    %34 = arith.select %32, %30, %33 : vector<128x64xi1>, vector<128x64xf32>
    %c127_i32 = arith.constant 127 : i32
    %35 = tpu.dynamic_rotate %8 by %c127_i32 dim 0 : vector<128x64xf32>, i32 -> vector<128x64xf32>
    %cst_13 = arith.constant 0.000000e+00 : f32
    %36 = vector.shape_cast %29 : vector<128x1xi1> to vector<128x1xi1>
    %37 = vector.broadcast %36 : vector<128x1xi1> to vector<128x64xi1>
    %38 = vector.broadcast %cst_13 : f32 to vector<128x64xf32>
    %39 = arith.select %37, %35, %38 : vector<128x64xi1>, vector<128x64xf32>
    %c0_14 = arith.constant 0 : index
    %c0_15 = arith.constant 0 : index
    %c0_16 = arith.constant 0 : index
    %40 = vector.load %arg4[%c0_14, %c0_15, %c0_16] : memref<3x64x64xf32, #tpu.memory_space<vmem>>, vector<1x64x64xf32>
    %41 = vector.shape_cast %40 : vector<1x64x64xf32> to vector<64x64xf32>
    %cst_17 = arith.constant dense<0.000000e+00> : vector<128x64xf32>
    %42 = tpu.matmul %34, %41, %cst_17 {dimension_numbers = #tpu.dot_dimension_numbers<[1], [0], [0], [1], [0, 0, 1, 1], [], []>} : vector<128x64xf32>, vector<64x64xf32>, vector<128x64xf32> -> vector<128x64xf32>
    %c1 = arith.constant 1 : index
    %c0_18 = arith.constant 0 : index
    %c0_19 = arith.constant 0 : index
    %43 = vector.load %arg4[%c1, %c0_18, %c0_19] : memref<3x64x64xf32, #tpu.memory_space<vmem>>, vector<1x64x64xf32>
    %44 = vector.shape_cast %43 : vector<1x64x64xf32> to vector<64x64xf32>
    %cst_20 = arith.constant dense<0.000000e+00> : vector<128x64xf32>
    %45 = tpu.matmul %8, %44, %cst_20 {dimension_numbers = #tpu.dot_dimension_numbers<[1], [0], [0], [1], [0, 0, 1, 1], [], []>} : vector<128x64xf32>, vector<64x64xf32>, vector<128x64xf32> -> vector<128x64xf32>
    %46 = arith.addf %42, %45 : vector<128x64xf32>
    %c2 = arith.constant 2 : index
    %c0_21 = arith.constant 0 : index
    %c0_22 = arith.constant 0 : index
    %47 = vector.load %arg4[%c2, %c0_21, %c0_22] : memref<3x64x64xf32, #tpu.memory_space<vmem>>, vector<1x64x64xf32>
    %48 = vector.shape_cast %47 : vector<1x64x64xf32> to vector<64x64xf32>
    %cst_23 = arith.constant dense<0.000000e+00> : vector<128x64xf32>
    %49 = tpu.matmul %39, %48, %cst_23 {dimension_numbers = #tpu.dot_dimension_numbers<[1], [0], [0], [1], [0, 0, 1, 1], [], []>} : vector<128x64xf32>, vector<64x64xf32>, vector<128x64xf32> -> vector<128x64xf32>
    %50 = arith.addf %46, %49 : vector<128x64xf32>
    %c0_24 = arith.constant 0 : index
    %c0_25 = arith.constant 0 : index
    %51 = vector.load %arg5[%c0_24, %c0_25] : memref<1x64xf32, #tpu.memory_space<vmem>>, vector<1x64xf32>
    %52 = vector.broadcast %51 : vector<1x64xf32> to vector<128x64xf32>
    %53 = arith.addf %50, %52 : vector<128x64xf32>
    %cst_26 = arith.constant 0.000000e+00 : f32
    %54 = vector.broadcast %cst_26 : f32 to vector<128x64xf32>
    %55 = arith.maximumf %53, %54 : vector<128x64xf32>
    %56 = vector.shape_cast %55 : vector<128x64xf32> to vector<8x16x64xf32>
    %57 = vector.extract_strided_slice %56 {offsets = [0, 0, 0], sizes = [8, 1, 64], strides = [1, 1, 1]} : vector<8x16x64xf32> to vector<8x1x64xf32>
    %58 = vector.shape_cast %57 : vector<8x1x64xf32> to vector<8x64xf32>
    %59 = vector.extract_strided_slice %56 {offsets = [0, 1, 0], sizes = [8, 1, 64], strides = [1, 1, 1]} : vector<8x16x64xf32> to vector<8x1x64xf32>
    %60 = vector.shape_cast %59 : vector<8x1x64xf32> to vector<8x64xf32>
    %61 = arith.maximumf %58, %60 : vector<8x64xf32>
    %62 = vector.extract_strided_slice %56 {offsets = [0, 2, 0], sizes = [8, 1, 64], strides = [1, 1, 1]} : vector<8x16x64xf32> to vector<8x1x64xf32>
    %63 = vector.shape_cast %62 : vector<8x1x64xf32> to vector<8x64xf32>
    %64 = vector.extract_strided_slice %56 {offsets = [0, 3, 0], sizes = [8, 1, 64], strides = [1, 1, 1]} : vector<8x16x64xf32> to vector<8x1x64xf32>
    %65 = vector.shape_cast %64 : vector<8x1x64xf32> to vector<8x64xf32>
    %66 = arith.maximumf %63, %65 : vector<8x64xf32>
    %67 = tpu.concatenate %61, %66 in 1 : vector<8x64xf32>, vector<8x64xf32> -> vector<8x128xf32>
    %c0_27 = arith.constant 0 : index
    %c0_28 = arith.constant 0 : index
    %68 = vector.load %arg11[%c0_27, %c0_28] : memref<8x512xf32, #tpu.memory_space<vmem>>, vector<8x128xf32>
    tpu.vector_store %arg11[%c0_27, %c0_28], %67 {strides = array<i32>} : memref<8x512xf32, #tpu.memory_space<vmem>>, vector<8x128xf32>,
    %69 = vector.extract_strided_slice %56 {offsets = [0, 4, 0], sizes = [8, 1, 64], strides = [1, 1, 1]} : vector<8x16x64xf32> to vector<8x1x64xf32>
    %70 = vector.shape_cast %69 : vector<8x1x64xf32> to vector<8x64xf32>
    %71 = vector.extract_strided_slice %56 {offsets = [0, 5, 0], sizes = [8, 1, 64], strides = [1, 1, 1]} : vector<8x16x64xf32> to vector<8x1x64xf32>
    %72 = vector.shape_cast %71 : vector<8x1x64xf32> to vector<8x64xf32>
    %73 = arith.maximumf %70, %72 : vector<8x64xf32>
    %74 = vector.extract_strided_slice %56 {offsets = [0, 6, 0], sizes = [8, 1, 64], strides = [1, 1, 1]} : vector<8x16x64xf32> to vector<8x1x64xf32>
    %75 = vector.shape_cast %74 : vector<8x1x64xf32> to vector<8x64xf32>
    %76 = vector.extract_strided_slice %56 {offsets = [0, 7, 0], sizes = [8, 1, 64], strides = [1, 1, 1]} : vector<8x16x64xf32> to vector<8x1x64xf32>
    %77 = vector.shape_cast %76 : vector<8x1x64xf32> to vector<8x64xf32>
    %78 = arith.maximumf %75, %77 : vector<8x64xf32>
    %79 = tpu.concatenate %73, %78 in 1 : vector<8x64xf32>, vector<8x64xf32> -> vector<8x128xf32>
    %c0_29 = arith.constant 0 : index
    %c128 = arith.constant 128 : index
    %80 = vector.load %arg11[%c0_29, %c128] : memref<8x512xf32, #tpu.memory_space<vmem>>, vector<8x128xf32>
    tpu.vector_store %arg11[%c0_29, %c128], %79 {strides = array<i32>} : memref<8x512xf32, #tpu.memory_space<vmem>>, vector<8x128xf32>,
    %81 = vector.extract_strided_slice %56 {offsets = [0, 8, 0], sizes = [8, 1, 64], strides = [1, 1, 1]} : vector<8x16x64xf32> to vector<8x1x64xf32>
    %82 = vector.shape_cast %81 : vector<8x1x64xf32> to vector<8x64xf32>
    %83 = vector.extract_strided_slice %56 {offsets = [0, 9, 0], sizes = [8, 1, 64], strides = [1, 1, 1]} : vector<8x16x64xf32> to vector<8x1x64xf32>
    %84 = vector.shape_cast %83 : vector<8x1x64xf32> to vector<8x64xf32>
    %85 = arith.maximumf %82, %84 : vector<8x64xf32>
    %86 = vector.extract_strided_slice %56 {offsets = [0, 10, 0], sizes = [8, 1, 64], strides = [1, 1, 1]} : vector<8x16x64xf32> to vector<8x1x64xf32>
    %87 = vector.shape_cast %86 : vector<8x1x64xf32> to vector<8x64xf32>
    %88 = vector.extract_strided_slice %56 {offsets = [0, 11, 0], sizes = [8, 1, 64], strides = [1, 1, 1]} : vector<8x16x64xf32> to vector<8x1x64xf32>
    %89 = vector.shape_cast %88 : vector<8x1x64xf32> to vector<8x64xf32>
    %90 = arith.maximumf %87, %89 : vector<8x64xf32>
    %91 = tpu.concatenate %85, %90 in 1 : vector<8x64xf32>, vector<8x64xf32> -> vector<8x128xf32>
    %c0_30 = arith.constant 0 : index
    %c256 = arith.constant 256 : index
    %92 = vector.load %arg11[%c0_30, %c256] : memref<8x512xf32, #tpu.memory_space<vmem>>, vector<8x128xf32>
    tpu.vector_store %arg11[%c0_30, %c256], %91 {strides = array<i32>} : memref<8x512xf32, #tpu.memory_space<vmem>>, vector<8x128xf32>,
    %93 = vector.extract_strided_slice %56 {offsets = [0, 12, 0], sizes = [8, 1, 64], strides = [1, 1, 1]} : vector<8x16x64xf32> to vector<8x1x64xf32>
    %94 = vector.shape_cast %93 : vector<8x1x64xf32> to vector<8x64xf32>
    %95 = vector.extract_strided_slice %56 {offsets = [0, 13, 0], sizes = [8, 1, 64], strides = [1, 1, 1]} : vector<8x16x64xf32> to vector<8x1x64xf32>
    %96 = vector.shape_cast %95 : vector<8x1x64xf32> to vector<8x64xf32>
    %97 = arith.maximumf %94, %96 : vector<8x64xf32>
    %98 = vector.extract_strided_slice %56 {offsets = [0, 14, 0], sizes = [8, 1, 64], strides = [1, 1, 1]} : vector<8x16x64xf32> to vector<8x1x64xf32>
    %99 = vector.shape_cast %98 : vector<8x1x64xf32> to vector<8x64xf32>
    %100 = vector.extract_strided_slice %56 {offsets = [0, 15, 0], sizes = [8, 1, 64], strides = [1, 1, 1]} : vector<8x16x64xf32> to vector<8x1x64xf32>
    %101 = vector.shape_cast %100 : vector<8x1x64xf32> to vector<8x64xf32>
    %102 = arith.maximumf %99, %101 : vector<8x64xf32>
    %103 = tpu.concatenate %97, %102 in 1 : vector<8x64xf32>, vector<8x64xf32> -> vector<8x128xf32>
    %c0_31 = arith.constant 0 : index
    %c384 = arith.constant 384 : index
    %104 = vector.load %arg11[%c0_31, %c384] : memref<8x512xf32, #tpu.memory_space<vmem>>, vector<8x128xf32>
    tpu.vector_store %arg11[%c0_31, %c384], %103 {strides = array<i32>} : memref<8x512xf32, #tpu.memory_space<vmem>>, vector<8x128xf32>,
    %c0_32 = arith.constant 0 : index
    %c0_33 = arith.constant 0 : index
    %105 = vector.load %arg11[%c0_32, %c0_33] : memref<8x512xf32, #tpu.memory_space<vmem>>, vector<8x512xf32>
    %c0_34 = arith.constant 0 : index
    %c0_35 = arith.constant 0 : index
    %106 = vector.load %arg6[%c0_34, %c0_35] : memref<512x128xf32, #tpu.memory_space<vmem>>, vector<512x128xf32>
    %cst_36 = arith.constant dense<0.000000e+00> : vector<8x128xf32>
    %107 = tpu.matmul %105, %106, %cst_36 {dimension_numbers = #tpu.dot_dimension_numbers<[1], [0], [0], [1], [0, 0, 1, 1], [], []>} : vector<8x512xf32>, vector<512x128xf32>, vector<8x128xf32> -> vector<8x128xf32>
    %c0_37 = arith.constant 0 : index
    %c0_38 = arith.constant 0 : index
    %108 = vector.load %arg7[%c0_37, %c0_38] : memref<1x128xf32, #tpu.memory_space<vmem>>, vector<1x128xf32>
    %109 = vector.broadcast %108 : vector<1x128xf32> to vector<8x128xf32>
    %110 = arith.addf %107, %109 : vector<8x128xf32>
    %cst_39 = arith.constant 0.000000e+00 : f32
    %111 = vector.broadcast %cst_39 : f32 to vector<8x128xf32>
    %112 = arith.maximumf %110, %111 : vector<8x128xf32>
    %c0_40 = arith.constant 0 : index
    %c0_41 = arith.constant 0 : index
    %113 = vector.load %arg8[%c0_40, %c0_41] : memref<128x128xf32, #tpu.memory_space<vmem>>, vector<128x128xf32>
    %cst_42 = arith.constant dense<0.000000e+00> : vector<8x128xf32>
    %114 = tpu.matmul %112, %113, %cst_42 {dimension_numbers = #tpu.dot_dimension_numbers<[1], [0], [0], [1], [0, 0, 1, 1], [], []>} : vector<8x128xf32>, vector<128x128xf32>, vector<8x128xf32> -> vector<8x128xf32>
    %c0_43 = arith.constant 0 : index
    %c0_44 = arith.constant 0 : index
    %115 = vector.load %arg9[%c0_43, %c0_44] : memref<1x128xf32, #tpu.memory_space<vmem>>, vector<1x128xf32>
    %116 = vector.broadcast %115 : vector<1x128xf32> to vector<8x128xf32>
    %117 = arith.addf %114, %116 : vector<8x128xf32>
    %c0_45 = arith.constant 0 : index
    %c0_46 = arith.constant 0 : index
    %118 = vector.load %arg10[%c0_45, %c0_46] : memref<8x128xf32, #tpu.memory_space<vmem>>, vector<8x128xf32>
    tpu.vector_store %arg10[%c0_45, %c0_46], %117 {strides = array<i32>} : memref<8x128xf32, #tpu.memory_space<vmem>>, vector<8x128xf32>,
    return
  }
  func.func @transform_0(%arg0: i32) -> (i32, i32, i32) {
    %c0_i32 = arith.constant 0 : i32
    %c0_i32_0 = arith.constant 0 : i32
    %c0_i32_1 = arith.constant 0 : i32
    return %arg0, %c0_i32, %c0_i32_0 : i32, i32, i32
  }
  func.func @transform_1(%arg0: i32) -> (i32, i32) {
    %c0_i32 = arith.constant 0 : i32
    %c0_i32_0 = arith.constant 0 : i32
    %c0_i32_1 = arith.constant 0 : i32
    return %c0_i32, %c0_i32_0 : i32, i32
  }
  func.func @transform_2(%arg0: i32) -> (i32, i32) {
    %c0_i32 = arith.constant 0 : i32
    %c0_i32_0 = arith.constant 0 : i32
    %c0_i32_1 = arith.constant 0 : i32
    return %c0_i32, %c0_i32_0 : i32, i32
  }
  func.func @transform_3(%arg0: i32) -> (i32, i32, i32) {
    %c0_i32 = arith.constant 0 : i32
    %c0_i32_0 = arith.constant 0 : i32
    %c0_i32_1 = arith.constant 0 : i32
    %c0_i32_2 = arith.constant 0 : i32
    return %c0_i32, %c0_i32_0, %c0_i32_1 : i32, i32, i32
  }
  func.func @transform_4(%arg0: i32) -> (i32, i32) {
    %c0_i32 = arith.constant 0 : i32
    %c0_i32_0 = arith.constant 0 : i32
    %c0_i32_1 = arith.constant 0 : i32
    return %c0_i32, %c0_i32_0 : i32, i32
  }
  func.func @transform_5(%arg0: i32) -> (i32, i32) {
    %c0_i32 = arith.constant 0 : i32
    %c0_i32_0 = arith.constant 0 : i32
    %c0_i32_1 = arith.constant 0 : i32
    return %c0_i32, %c0_i32_0 : i32, i32
  }
  func.func @transform_6(%arg0: i32) -> (i32, i32) {
    %c0_i32 = arith.constant 0 : i32
    %c0_i32_0 = arith.constant 0 : i32
    %c0_i32_1 = arith.constant 0 : i32
    return %c0_i32, %c0_i32_0 : i32, i32
  }
  func.func @transform_7(%arg0: i32) -> (i32, i32) {
    %c0_i32 = arith.constant 0 : i32
    %c0_i32_0 = arith.constant 0 : i32
    %c0_i32_1 = arith.constant 0 : i32
    return %c0_i32, %c0_i32_0 : i32, i32
  }
  func.func @transform_8(%arg0: i32) -> (i32, i32) {
    %c0_i32 = arith.constant 0 : i32
    %c0_i32_0 = arith.constant 0 : i32
    %c0_i32_1 = arith.constant 0 : i32
    return %c0_i32, %c0_i32_0 : i32, i32
  }
  func.func @transform_9(%arg0: i32) -> (i32, i32) {
    %c0_i32 = arith.constant 0 : i32
    %c0_i32_0 = arith.constant 0 : i32
    return %arg0, %c0_i32 : i32, i32
  }
}

</mosaic_0001>

<llo_original>
// kernel: tpu_custom_call.1
$region0: #{tpu_custom_call.1}
  #allocation0 [shape = 'u32[]', space=smem, size = 0x4, offset = 0x4, fixed_abs, tag = 'smem constant byte address 0x4 - core index']
  #allocation1 [shape = 'u32[72,128]{1,0:T(1,128)}', space=vmem, size = 0x9000, scoped, tag = 'internal scratch']
  #allocation2 [shape = 'f32[8,512]{1,0:T(8,128)}', space=vmem, size = 0x4000, scoped, tag = 'scratch operand']
  %s0 = inlined_call_operand.hbm [shape: f32[8,16,24], index: 0, kind: input, shape index: {}]
  %s1 = inlined_call_operand.hbm [shape: f32[24,64], index: 1, kind: input, shape index: {}]
  %s2 = inlined_call_operand.vmem [shape: f32[1,64], index: 2, kind: input, shape index: {}]
  %s3 = inlined_call_operand.hbm [shape: f32[3,64,64], index: 3, kind: input, shape index: {}]
  %s4 = inlined_call_operand.vmem [shape: f32[1,64], index: 4, kind: input, shape index: {}]
  %s5 = inlined_call_operand.hbm [shape: f32[512,128], index: 5, kind: input, shape index: {}]
  %s6 = inlined_call_operand.vmem [shape: f32[1,128], index: 6, kind: input, shape index: {}]
  %s7 = inlined_call_operand.hbm [shape: f32[128,128], index: 7, kind: input, shape index: {}]
  %s8 = inlined_call_operand.vmem [shape: f32[1,128], index: 8, kind: input, shape index: {}]
  %s9 = inlined_call_operand.hbm [shape: f32[8,128], index: 9, kind: output, shape index: {}]
  %s10 = sld [smem:[#allocation0]]
  $region66: #{tpu_custom_call.1} parent=0
    _
  %s12 = ssub.s32 1, %s10
  %s13 = scalar_select 0, %s12, %s10
  $region1: #{tpu_custom_call.1} parent=0
    #allocation3 [shape = 'u8[65536]{0}', space=vmem, size = 0x10000, scoped, tag = 'input window, operand 0, single buffered']
    #allocation4 [shape = 's32[1]{0}', space=sflag, size = 0x4, scoped, tag = 'scoped memory for tpu_custom_call.1']
    #allocation5 [shape = 's32[1]{0}', space=sflag, size = 0x4, scoped, tag = 'scoped memory for tpu_custom_call.1']
    #allocation6 [shape = 'u8[12288]{0}', space=vmem, size = 0x3000, scoped, tag = 'input window, operand 1, single buffered']
    #allocation7 [shape = 's32[1]{0}', space=sflag, size = 0x4, scoped, tag = 'scoped memory for tpu_custom_call.1']
    #allocation8 [shape = 'u8[98304]{0}', space=vmem, size = 0x18000, scoped, tag = 'input window, operand 3, single buffered']
    #allocation9 [shape = 'u8[262144]{0}', space=vmem, size = 0x40000, scoped, tag = 'input window, operand 5, single buffered']
    #allocation10 [shape = 's32[1]{0}', space=sflag, size = 0x4, scoped, tag = 'scoped memory for tpu_custom_call.1']
    #allocation11 [shape = 'u8[65536]{0}', space=vmem, size = 0x10000, scoped, tag = 'input window, operand 7, single buffered']
    #allocation12 [shape = 'u8[4096]{0}', space=vmem, size = 0x1000, scoped, tag = 'output window, operand 0, single buffered']
    %14 = vsyncpa [#allocation4], 0
    %15 = vsyncpa [#allocation7], 0
    %16 = vsyncpa [#allocation10], 0
    %17 = vsyncpa [#allocation5], 0
    // Predicated region
    $region2: #{tpu_custom_call.1} parent=1 // pred_check
      _
    $region3: #{tpu_custom_call.1} parent=1 // pred_check_branch
      %19 = sbr.rel (0) target = $region5
    $region4: #{tpu_custom_call.1} parent=1 // pred_region
      %21 = vsyncadd [#allocation4], 0
      %s22 = sshll.u32 %s0, 4
      %s23 = int_to_ptr.hbm [resolvable:$true] %s22
      %s24 = sshll.u32 [#allocation3], 4
      %s25 = int_to_ptr.vmem [resolvable:$true] %s24
      %30 = dma.hbm_to_vmem [thread:$0]  %s23, 2048, %s25, [#allocation4], 128, 128, 8
    $region5: #{tpu_custom_call.1} parent=1 // pred_fallthru
      _
    // Predicated region
    $region6: #{tpu_custom_call.1} parent=1 // pred_check
      _
    $region7: #{tpu_custom_call.1} parent=1 // pred_check_branch
      %32 = sbr.rel (0) target = $region9
    $region8: #{tpu_custom_call.1} parent=1 // pred_region
      %34 = vsyncadd [#allocation7], 0
      %s35 = sshll.u32 %s1, 4
      %s36 = int_to_ptr.hbm [resolvable:$true] %s35
      %s37 = sshll.u32 [#allocation6], 4
      %s38 = int_to_ptr.vmem [resolvable:$true] %s37
      %43 = dma.hbm_to_vmem [thread:$0]  %s36, 384, %s38, [#allocation7], 128, 128, 8
    $region9: #{tpu_custom_call.1} parent=1 // pred_fallthru
      _
    // Predicated region
    $region10: #{tpu_custom_call.1} parent=1 // pred_check
      _
    $region11: #{tpu_custom_call.1} parent=1 // pred_check_branch
      %45 = sbr.rel (0) target = $region13
    $region12: #{tpu_custom_call.1} parent=1 // pred_region
      _
    $region13: #{tpu_custom_call.1} parent=1 // pred_fallthru
      _
    // Predicated region
    $region14: #{tpu_custom_call.1} parent=1 // pred_check
      _
    $region15: #{tpu_custom_call.1} parent=1 // pred_check_branch
      %47 = sbr.rel (0) target = $region17
    $region16: #{tpu_custom_call.1} parent=1 // pred_region
      %49 = vsyncadd [#allocation7], 0
      %s50 = sshll.u32 %s3, 4
      %s51 = int_to_ptr.hbm [resolvable:$true] %s50
      %s52 = sshll.u32 [#allocation8], 4
      %s53 = int_to_ptr.vmem [resolvable:$true] %s52
      %58 = dma.hbm_to_vmem [thread:$0]  %s51, 3072, %s53, [#allocation7], 128, 128, 8
    $region17: #{tpu_custom_call.1} parent=1 // pred_fallthru
      _
    // Predicated region
    $region18: #{tpu_custom_call.1} parent=1 // pred_check
      _
    $region19: #{tpu_custom_call.1} parent=1 // pred_check_branch
      %60 = sbr.rel (0) target = $region21
    $region20: #{tpu_custom_call.1} parent=1 // pred_region
      _
    $region21: #{tpu_custom_call.1} parent=1 // pred_fallthru
      _
    // Predicated region
    $region22: #{tpu_custom_call.1} parent=1 // pred_check
      _
    $region23: #{tpu_custom_call.1} parent=1 // pred_check_branch
      %62 = sbr.rel (0) target = $region25
    $region24: #{tpu_custom_call.1} parent=1 // pred_region
      %64 = vsyncadd [#allocation10], 0
      %s65 = sshll.u32 %s5, 4
      %s66 = int_to_ptr.hbm [resolvable:$true] %s65
      %s67 = sshll.u32 [#allocation9], 4
      %s68 = int_to_ptr.vmem [resolvable:$true] %s67
      %73 = dma.hbm_to_vmem [thread:$0]  %s66, 8192, %s68, [#allocation10], 128, 128, 8
    $region25: #{tpu_custom_call.1} parent=1 // pred_fallthru
      _
    // Predicated region
    $region26: #{tpu_custom_call.1} parent=1 // pred_check
      _
    $region27: #{tpu_custom_call.1} parent=1 // pred_check_branch
      %75 = sbr.rel (0) target = $region29
    $region28: #{tpu_custom_call.1} parent=1 // pred_region
      _
    $region29: #{tpu_custom_call.1} parent=1 // pred_fallthru
      _
    // Predicated region
    $region30: #{tpu_custom_call.1} parent=1 // pred_check
      _
    $region31: #{tpu_custom_call.1} parent=1 // pred_check_branch
      %77 = sbr.rel (0) target = $region33
    $region32: #{tpu_custom_call.1} parent=1 // pred_region
      %79 = vsyncadd [#allocation10], 0
      %s80 = sshll.u32 %s7, 4
      %s81 = int_to_ptr.hbm [resolvable:$true] %s80
      %s82 = sshll.u32 [#allocation11], 4
      %s83 = int_to_ptr.vmem [resolvable:$true] %s82
      %88 = dma.hbm_to_vmem [thread:$0]  %s81, 2048, %s83, [#allocation10], 128, 128, 8
    $region33: #{tpu_custom_call.1} parent=1 // pred_fallthru
      _
    // Predicated region
    $region34: #{tpu_custom_call.1} parent=1 // pred_check
      _
    $region35: #{tpu_custom_call.1} parent=1 // pred_check_branch
      %90 = sbr.rel (0) target = $region37
    $region36: #{tpu_custom_call.1} parent=1 // pred_region
      _
    $region37: #{tpu_custom_call.1} parent=1 // pred_fallthru
      _
    // Predicated region
    $region38: #{tpu_custom_call.1} parent=1 // pred_check
      _
    $region39: #{tpu_custom_call.1} parent=1 // pred_check_branch
      %92 = sbr.rel (0) target = $region41
    $region40: #{tpu_custom_call.1} parent=1 // pred_region
      %94 = dma.done [#allocation4], 2048
    $region41: #{tpu_custom_call.1} parent=1 // pred_fallthru
      _
    // Predicated region
    $region42: #{tpu_custom_call.1} parent=1 // pred_check
      _
    $region43: #{tpu_custom_call.1} parent=1 // pred_check_branch
      %96 = sbr.rel (0) target = $region45
    $region44: #{tpu_custom_call.1} parent=1 // pred_region
      %98 = dma.done [#allocation7], 384
    $region45: #{tpu_custom_call.1} parent=1 // pred_fallthru
      _
    // Predicated region
    $region46: #{tpu_custom_call.1} parent=1 // pred_check
      _
    $region47: #{tpu_custom_call.1} parent=1 // pred_check_branch
      %100 = sbr.rel (0) target = $region49
    $region48: #{tpu_custom_call.1} parent=1 // pred_region
      %102 = dma.done [#allocation7], 3072
    $region49: #{tpu_custom_call.1} parent=1 // pred_fallthru
      _
    // Predicated region
    $region50: #{tpu_custom_call.1} parent=1 // pred_check
      _
    $region51: #{tpu_custom_call.1} parent=1 // pred_check_branch
      %104 = sbr.rel (0) target = $region53
    $region52: #{tpu_custom_call.1} parent=1 // pred_region
      %106 = dma.done [#allocation10], 8192
    $region53: #{tpu_custom_call.1} parent=1 // pred_fallthru
      _
    // Predicated region
    $region54: #{tpu_custom_call.1} parent=1 // pred_check
      _
    $region55: #{tpu_custom_call.1} parent=1 // pred_check_branch
      %108 = sbr.rel (0) target = $region57
    $region56: #{tpu_custom_call.1} parent=1 // pred_region
      %110 = dma.done [#allocation10], 2048
    $region57: #{tpu_custom_call.1} parent=1 // pred_fallthru
      _
    %v111 = vld [vmem:[#allocation3] sm:$0xff]
    %v112 = vld [vmem:[#allocation3 + $0x8] sm:$0xff]
    %v113 = vld [vmem:[#allocation3 + $0x10] sm:$0xff]
    %v114 = vld [vmem:[#allocation3 + $0x18] sm:$0xff]
    %v115 = vld [vmem:[#allocation3 + $0x20] sm:$0xff]
    %v116 = vld [vmem:[#allocation3 + $0x28] sm:$0xff]
    %v117 = vld [vmem:[#allocation3 + $0x30] sm:$0xff]
    %v118 = vld [vmem:[#allocation3 + $0x38] sm:$0xff]
    %v119 = vld [vmem:[#allocation3 + $0x40] sm:$0xff]
    %v120 = vld [vmem:[#allocation3 + $0x48] sm:$0xff]
    %v121 = vld [vmem:[#allocation3 + $0x50] sm:$0xff]
    %v122 = vld [vmem:[#allocation3 + $0x58] sm:$0xff]
    %v123 = vld [vmem:[#allocation3 + $0x60] sm:$0xff]
    %v124 = vld [vmem:[#allocation3 + $0x68] sm:$0xff]
    %v125 = vld [vmem:[#allocation3 + $0x70] sm:$0xff]
    %v126 = vld [vmem:[#allocation3 + $0x78] sm:$0xff]
    %v127 = vld [vmem:[#allocation6] sm:$0xff]
    %v128 = vld [vmem:[#allocation6 + $0x8] sm:$0xff]
    %v129 = vld [vmem:[#allocation6 + $0x10] sm:$0xff]
    %v130 = vld [vmem:[%s2] sm:$0x1]
    %v132 = vperm.slane %v130, 0
    %vm134 = vcmask 195584
    %v136 = vsel %vm134, %v111, 0
    %v139 = vsel %vm134, %v112, 0
    %v142 = vsel %vm134, %v113, 0
    %v145 = vsel %vm134, %v114, 0
    %v148 = vsel %vm134, %v115, 0
    %v151 = vsel %vm134, %v116, 0
    %v154 = vsel %vm134, %v117, 0
    %v157 = vsel %vm134, %v118, 0
    %v160 = vsel %vm134, %v119, 0
    %v163 = vsel %vm134, %v120, 0
    %v166 = vsel %vm134, %v121, 0
    %v169 = vsel %vm134, %v122, 0
    %v172 = vsel %vm134, %v123, 0
    %v175 = vsel %vm134, %v124, 0
    %v178 = vsel %vm134, %v125, 0
    %v181 = vsel %vm134, %v126, 0
    %183 = vmatpush.msra.mxu0 0.0
    %184 = vmatpush.msra.mxu0 0.0
    %185 = vmatpush.msra.mxu0 0.0
    %186 = vmatpush.msra.mxu0 0.0
    %187 = vmatpush.msra.mxu0 0.0
    %188 = vmatpush.msra.mxu0 0.0
    %189 = vmatpush.msra.mxu0 0.0
    %190 = vmatpush.msra.mxu0 0.0
    %191 = vmatpush.msra.mxu0 0.0
    %192 = vmatpush.msra.mxu0 0.0
    %193 = vmatpush.msra.mxu0 0.0
    %194 = vmatpush.msra.mxu0 0.0
    %195 = vmatpush.msra.mxu0 0.0
    %196 = vmatpush.msra.mxu0 %v129
    %197 = vmatpush.msra.mxu0 %v128
    %198 = vmatpush.msra.mxu0 %v127
    %199 = vmatmul.f32.gmra.mxu0 %v136
    %v200 = vpop.f32.mrf.mxu0
    %v201 = vadd.f32 %v132, %v200
    %202 = vmatmul.f32.gmra.mxu0 %v139
    %v203 = vpop.f32.mrf.mxu0
    %v204 = vadd.f32 %v132, %v203
    %205 = vmatmul.f32.gmra.mxu0 %v142
    %v206 = vpop.f32.mrf.mxu0
    %v207 = vadd.f32 %v132, %v206
    %208 = vmatmul.f32.gmra.mxu0 %v145
    %v209 = vpop.f32.mrf.mxu0
    %v210 = vadd.f32 %v132, %v209
    %211 = vmatmul.f32.gmra.mxu0 %v148
    %v212 = vpop.f32.mrf.mxu0
    %v213 = vadd.f32 %v132, %v212
    %214 = vmatmul.f32.gmra.mxu0 %v151
    %v215 = vpop.f32.mrf.mxu0
    %v216 = vadd.f32 %v132, %v215
    %217 = vmatmul.f32.gmra.mxu0 %v154
    %v218 = vpop.f32.mrf.mxu0
    %v219 = vadd.f32 %v132, %v218
    %220 = vmatmul.f32.gmra.mxu0 %v157
    %v221 = vpop.f32.mrf.mxu0
    %v222 = vadd.f32 %v132, %v221
    %223 = vmatmul.f32.gmra.mxu0 %v160
    %v224 = vpop.f32.mrf.mxu0
    %v225 = vadd.f32 %v132, %v224
    %226 = vmatmul.f32.gmra.mxu0 %v163
    %v227 = vpop.f32.mrf.mxu0
    %v228 = vadd.f32 %v132, %v227
    %229 = vmatmul.f32.gmra.mxu0 %v166
    %v230 = vpop.f32.mrf.mxu0
    %v231 = vadd.f32 %v132, %v230
    %232 = vmatmul.f32.gmra.mxu0 %v169
    %v233 = vpop.f32.mrf.mxu0
    %v234 = vadd.f32 %v132, %v233
    %235 = vmatmul.f32.gmra.mxu0 %v172
    %v236 = vpop.f32.mrf.mxu0
    %v237 = vadd.f32 %v132, %v236
    %238 = vmatmul.f32.gmra.mxu0 %v175
    %v239 = vpop.f32.mrf.mxu0
    %v240 = vadd.f32 %v132, %v239
    %241 = vmatmul.f32.gmra.mxu0 %v178
    %v242 = vpop.f32.mrf.mxu0
    %v243 = vadd.f32 %v132, %v242
    %244 = vmatmul.f32.gmra.mxu0 %v181
    %v245 = vpop.f32.mrf.mxu0
    %v246 = vadd.f32 %v132, %v245
    %247 = vdwg.mxu0
    %v248 = vmax.f32 %v201, 0.0
    %v249 = vmax.f32 %v204, 0.0
    %v250 = vmax.f32 %v207, 0.0
    %v251 = vmax.f32 %v210, 0.0
    %v252 = vmax.f32 %v213, 0.0
    %v253 = vmax.f32 %v216, 0.0
    %v254 = vmax.f32 %v219, 0.0
    %v255 = vmax.f32 %v222, 0.0
    %v256 = vmax.f32 %v225, 0.0
    %v257 = vmax.f32 %v228, 0.0
    %v258 = vmax.f32 %v231, 0.0
    %v259 = vmax.f32 %v234, 0.0
    %v260 = vmax.f32 %v237, 0.0
    %v261 = vmax.f32 %v240, 0.0
    %v262 = vmax.f32 %v243, 0.0
    %v263 = vmax.f32 %v246, 0.0
    %v264 = vlaneseq
    %v265 = vshrl.u32 %v264, 7
    %v266 = vadd.s32 %v265, 8
    %v267 = vadd.s32 %v265, 16
    %v268 = vadd.s32 %v265, 24
    %v269 = vadd.s32 %v265, 32
    %v270 = vadd.s32 %v265, 40
    %v271 = vadd.s32 %v265, 48
    %v272 = vadd.s32 %v265, 56
    %v273 = vadd.s32 %v265, 64
    %v274 = vadd.s32 %v265, 72
    %v275 = vadd.s32 %v265, 80
    %v276 = vadd.s32 %v265, 88
    %v277 = vadd.s32 %v265, 96
    %v278 = vadd.s32 %v265, 104
    %v279 = vadd.s32 %v265, 112
    %v280 = vadd.s32 %v265, 120
    %vm281 = vcmp.lt.s32.totalorder %v265, 0
    %v282 = vsub.s32 0, %v265
    %v283 = vsel %vm281, %v282, %v265
    %v284 = vshrl.u32 %v283, 4
    %v285 = vand.u32 %v283, 15
    %v286 = vsub.s32 0, %v285
    %v287 = vsel %vm281, %v286, %v285
    %vm288 = vcmp.lt.s32.totalorder %v266, 0
    %v289 = vsub.s32 0, %v266
    %v290 = vsel %vm288, %v289, %v266
    %v291 = vshrl.u32 %v290, 4
    %v292 = vand.u32 %v290, 15
    %v293 = vsub.s32 0, %v292
    %v294 = vsel %vm288, %v293, %v292
    %vm295 = vcmp.lt.s32.totalorder %v267, 0
    %v296 = vsub.s32 0, %v267
    %v297 = vsel %vm295, %v296, %v267
    %v298 = vshrl.u32 %v297, 4
    %v299 = vand.u32 %v297, 15
    %v300 = vsub.s32 0, %v299
    %v301 = vsel %vm295, %v300, %v299
    %vm302 = vcmp.lt.s32.totalorder %v268, 0
    %v303 = vsub.s32 0, %v268
    %v304 = vsel %vm302, %v303, %v268
    %v305 = vshrl.u32 %v304, 4
    %v306 = vand.u32 %v304, 15
    %v307 = vsub.s32 0, %v306
    %v308 = vsel %vm302, %v307, %v306
    %vm309 = vcmp.lt.s32.totalorder %v269, 0
    %v310 = vsub.s32 0, %v269
    %v311 = vsel %vm309, %v310, %v269
    %v312 = vshrl.u32 %v311, 4
    %v313 = vand.u32 %v311, 15
    %v314 = vsub.s32 0, %v313
    %v315 = vsel %vm309, %v314, %v313
    %vm316 = vcmp.lt.s32.totalorder %v270, 0
    %v317 = vsub.s32 0, %v270
    %v318 = vsel %vm316, %v317, %v270
    %v319 = vshrl.u32 %v318, 4
    %v320 = vand.u32 %v318, 15
    %v321 = vsub.s32 0, %v320
    %v322 = vsel %vm316, %v321, %v320
    %vm323 = vcmp.lt.s32.totalorder %v271, 0
    %v324 = vsub.s32 0, %v271
    %v325 = vsel %vm323, %v324, %v271
    %v326 = vshrl.u32 %v325, 4
    %v327 = vand.u32 %v325, 15
    %v328 = vsub.s32 0, %v327
    %v329 = vsel %vm323, %v328, %v327
    %vm330 = vcmp.lt.s32.totalorder %v272, 0
    %v331 = vsub.s32 0, %v272
    %v332 = vsel %vm330, %v331, %v272
    %v333 = vshrl.u32 %v332, 4
    %v334 = vand.u32 %v332, 15
    %v335 = vsub.s32 0, %v334
    %v336 = vsel %vm330, %v335, %v334
    %vm337 = vcmp.lt.s32.totalorder %v273, 0
    %v338 = vsub.s32 0, %v273
    %v339 = vsel %vm337, %v338, %v273
    %v340 = vshrl.u32 %v339, 4
    %v341 = vand.u32 %v339, 15
    %v342 = vsub.s32 0, %v341
    %v343 = vsel %vm337, %v342, %v341
    %vm344 = vcmp.lt.s32.totalorder %v274, 0
    %v345 = vsub.s32 0, %v274
    %v346 = vsel %vm344, %v345, %v274
    %v347 = vshrl.u32 %v346, 4
    %v348 = vand.u32 %v346, 15
    %v349 = vsub.s32 0, %v348
    %v350 = vsel %vm344, %v349, %v348
    %vm351 = vcmp.lt.s32.totalorder %v275, 0
    %v352 = vsub.s32 0, %v275
    %v353 = vsel %vm351, %v352, %v275
    %v354 = vshrl.u32 %v353, 4
    %v355 = vand.u32 %v353, 15
    %v356 = vsub.s32 0, %v355
    %v357 = vsel %vm351, %v356, %v355
    %vm358 = vcmp.lt.s32.totalorder %v276, 0
    %v359 = vsub.s32 0, %v276
    %v360 = vsel %vm358, %v359, %v276
    %v361 = vshrl.u32 %v360, 4
    %v362 = vand.u32 %v360, 15
    %v363 = vsub.s32 0, %v362
    %v364 = vsel %vm358, %v363, %v362
    %vm365 = vcmp.lt.s32.totalorder %v277, 0
    %v366 = vsub.s32 0, %v277
    %v367 = vsel %vm365, %v366, %v277
    %v368 = vshrl.u32 %v367, 4
    %v369 = vand.u32 %v367, 15
    %v370 = vsub.s32 0, %v369
    %v371 = vsel %vm365, %v370, %v369
    %vm372 = vcmp.lt.s32.totalorder %v278, 0
    %v373 = vsub.s32 0, %v278
    %v374 = vsel %vm372, %v373, %v278
    %v375 = vshrl.u32 %v374, 4
    %v376 = vand.u32 %v374, 15
    %v377 = vsub.s32 0, %v376
    %v378 = vsel %vm372, %v377, %v376
    %vm379 = vcmp.lt.s32.totalorder %v279, 0
    %v380 = vsub.s32 0, %v279
    %v381 = vsel %vm379, %v380, %v279
    %v382 = vshrl.u32 %v381, 4
    %v383 = vand.u32 %v381, 15
    %v384 = vsub.s32 0, %v383
    %v385 = vsel %vm379, %v384, %v383
    %vm386 = vcmp.lt.s32.totalorder %v280, 0
    %v387 = vsub.s32 0, %v280
    %v388 = vsel %vm386, %v387, %v280
    %v389 = vshrl.u32 %v388, 4
    %v390 = vand.u32 %v388, 15
    %v391 = vsub.s32 0, %v390
    %v392 = vsel %vm386, %v391, %v390
    %vm393 = vcmp.ne.s32.totalorder %v287, 0
    %vm394 = vcmp.ne.s32.totalorder %v294, 0
    %vm395 = vcmp.ne.s32.totalorder %v301, 0
    %vm396 = vcmp.ne.s32.totalorder %v308, 0
    %vm397 = vcmp.ne.s32.totalorder %v315, 0
    %vm398 = vcmp.ne.s32.totalorder %v322, 0
    %vm399 = vcmp.ne.s32.totalorder %v329, 0
    %vm400 = vcmp.ne.s32.totalorder %v336, 0
    %vm401 = vcmp.ne.s32.totalorder %v343, 0
    %vm402 = vcmp.ne.s32.totalorder %v350, 0
    %vm403 = vcmp.ne.s32.totalorder %v357, 0
    %vm404 = vcmp.ne.s32.totalorder %v364, 0
    %vm405 = vcmp.ne.s32.totalorder %v371, 0
    %vm406 = vcmp.ne.s32.totalorder %v378, 0
    %vm407 = vcmp.ne.s32.totalorder %v385, 0
    %vm408 = vcmp.ne.s32.totalorder %v392, 0
    %vm409 = vcmp.lt.s32.totalorder %v287, 0
    %vm410 = vcmp.lt.s32.totalorder %v294, 0
    %vm411 = vcmp.lt.s32.totalorder %v301, 0
    %vm412 = vcmp.lt.s32.totalorder %v308, 0
    %vm413 = vcmp.lt.s32.totalorder %v315, 0
    %vm414 = vcmp.lt.s32.totalorder %v322, 0
    %vm415 = vcmp.lt.s32.totalorder %v329, 0
    %vm416 = vcmp.lt.s32.totalorder %v336, 0
    %vm417 = vcmp.lt.s32.totalorder %v343, 0
    %vm418 = vcmp.lt.s32.totalorder %v350, 0
    %vm419 = vcmp.lt.s32.totalorder %v357, 0
    %vm420 = vcmp.lt.s32.totalorder %v364, 0
    %vm421 = vcmp.lt.s32.totalorder %v371, 0
    %vm422 = vcmp.lt.s32.totalorder %v378, 0
    %vm423 = vcmp.lt.s32.totalorder %v385, 0
    %vm424 = vcmp.lt.s32.totalorder %v392, 0
    %vm425 = vmand %vm409, %vm393
    %vm426 = vmand %vm410, %vm394
    %vm427 = vmand %vm411, %vm395
    %vm428 = vmand %vm412, %vm396
    %vm429 = vmand %vm413, %vm397
    %vm430 = vmand %vm414, %vm398
    %vm431 = vmand %vm415, %vm399
    %vm432 = vmand %vm416, %vm400
    %vm433 = vmand %vm417, %vm401
    %vm434 = vmand %vm418, %vm402
    %vm435 = vmand %vm419, %vm403
    %vm436 = vmand %vm420, %vm404
    %vm437 = vmand %vm421, %vm405
    %vm438 = vmand %vm422, %vm406
    %vm439 = vmand %vm423, %vm407
    %vm440 = vmand %vm424, %vm408
    %v441 = vadd.s32 %v287, 16
    %v442 = vadd.s32 %v294, 16
    %v443 = vadd.s32 %v301, 16
    %v444 = vadd.s32 %v308, 16
    %v445 = vadd.s32 %v315, 16
    %v446 = vadd.s32 %v322, 16
    %v447 = vadd.s32 %v329, 16
    %v448 = vadd.s32 %v336, 16
    %v449 = vadd.s32 %v343, 16
    %v450 = vadd.s32 %v350, 16
    %v451 = vadd.s32 %v357, 16
    %v452 = vadd.s32 %v364, 16
    %v453 = vadd.s32 %v371, 16
    %v454 = vadd.s32 %v378, 16
    %v455 = vadd.s32 %v385, 16
    %v456 = vadd.s32 %v392, 16
    %v457 = vsel %vm425, %v441, %v287
    %v458 = vsel %vm426, %v442, %v294
    %v459 = vsel %vm427, %v443, %v301
    %v460 = vsel %vm428, %v444, %v308
    %v461 = vsel %vm429, %v445, %v315
    %v462 = vsel %vm430, %v446, %v322
    %v463 = vsel %vm431, %v447, %v329
    %v464 = vsel %vm432, %v448, %v336
    %v465 = vsel %vm433, %v449, %v343
    %v466 = vsel %vm434, %v450, %v350
    %v467 = vsel %vm435, %v451, %v357
    %v468 = vsel %vm436, %v452, %v364
    %v469 = vsel %vm437, %v453, %v371
    %v470 = vsel %vm438, %v454, %v378
    %v471 = vsel %vm439, %v455, %v385
    %v472 = vsel %vm440, %v456, %v392
    %vm473 = vcmp.ne.s32.totalorder %v457, 0
    %vm474 = vcmp.ne.s32.totalorder %v458, 0
    %vm475 = vcmp.ne.s32.totalorder %v459, 0
    %vm476 = vcmp.ne.s32.totalorder %v460, 0
    %vm477 = vcmp.ne.s32.totalorder %v461, 0
    %vm478 = vcmp.ne.s32.totalorder %v462, 0
    %vm479 = vcmp.ne.s32.totalorder %v463, 0
    %vm480 = vcmp.ne.s32.totalorder %v464, 0
    %vm481 = vcmp.ne.s32.totalorder %v465, 0
    %vm482 = vcmp.ne.s32.totalorder %v466, 0
    %vm483 = vcmp.ne.s32.totalorder %v467, 0
    %vm484 = vcmp.ne.s32.totalorder %v468, 0
    %vm485 = vcmp.ne.s32.totalorder %v469, 0
    %vm486 = vcmp.ne.s32.totalorder %v470, 0
    %vm487 = vcmp.ne.s32.totalorder %v471, 0
    %vm488 = vcmp.ne.s32.totalorder %v472, 0
    %vm489 = vcmp.ne.s32.totalorder %v457, 15
    %vm490 = vcmp.ne.s32.totalorder %v458, 15
    %vm491 = vcmp.ne.s32.totalorder %v459, 15
    %vm492 = vcmp.ne.s32.totalorder %v460, 15
    %vm493 = vcmp.ne.s32.totalorder %v461, 15
    %vm494 = vcmp.ne.s32.totalorder %v462, 15
    %vm495 = vcmp.ne.s32.totalorder %v463, 15
    %vm496 = vcmp.ne.s32.totalorder %v464, 15
    %vm497 = vcmp.ne.s32.totalorder %v465, 15
    %vm498 = vcmp.ne.s32.totalorder %v466, 15
    %vm499 = vcmp.ne.s32.totalorder %v467, 15
    %vm500 = vcmp.ne.s32.totalorder %v468, 15
    %vm501 = vcmp.ne.s32.totalorder %v469, 15
    %vm502 = vcmp.ne.s32.totalorder %v470, 15
    %vm503 = vcmp.ne.s32.totalorder %v471, 15
    %vm504 = vcmp.ne.s32.totalorder %v472, 15
    %v505 = vrot.slane %v248, 7
    %v506 = vrot.slane %v249, 7
    %v507 = vrot.slane %v250, 7
    %v508 = vrot.slane %v251, 7
    %v509 = vrot.slane %v252, 7
    %v510 = vrot.slane %v253, 7
    %v511 = vrot.slane %v254, 7
    %v512 = vrot.slane %v255, 7
    %v513 = vrot.slane %v256, 7
    %v514 = vrot.slane %v257, 7
    %v515 = vrot.slane %v258, 7
    %v516 = vrot.slane %v259, 7
    %v517 = vrot.slane %v260, 7
    %v518 = vrot.slane %v261, 7
    %v519 = vrot.slane %v262, 7
    %v520 = vrot.slane %v263, 7
    %vm521 = vcmp.lt.s32.totalorder %v265, 1
    %v522 = vsel %vm521, %v519, %v520
    %v523 = vsel %vm521, %v518, %v519
    %v524 = vsel %vm521, %v517, %v518
    %v525 = vsel %vm521, %v516, %v517
    %v526 = vsel %vm521, %v515, %v516
    %v527 = vsel %vm521, %v514, %v515
    %v528 = vsel %vm521, %v513, %v514
    %v529 = vsel %vm521, %v512, %v513
    %v530 = vsel %vm521, %v511, %v512
    %v531 = vsel %vm521, %v510, %v511
    %v532 = vsel %vm521, %v509, %v510
    %v533 = vsel %vm521, %v508, %v509
    %v534 = vsel %vm521, %v507, %v508
    %v535 = vsel %vm521, %v506, %v507
    %v536 = vsel %vm521, %v505, %v506
    %v537 = vsel %vm521, %v520, %v505
    %v538 = vsel %vm473, 1, 0
    %v539 = vsel %vm474, 1, 0
    %v540 = vsel %vm475, 1, 0
    %v541 = vsel %vm476, 1, 0
    %v542 = vsel %vm477, 1, 0
    %v543 = vsel %vm478, 1, 0
    %v544 = vsel %vm479, 1, 0
    %v545 = vsel %vm480, 1, 0
    %v546 = vsel %vm481, 1, 0
    %v547 = vsel %vm482, 1, 0
    %v548 = vsel %vm483, 1, 0
    %v549 = vsel %vm484, 1, 0
    %v550 = vsel %vm485, 1, 0
    %v551 = vsel %vm486, 1, 0
    %v552 = vsel %vm487, 1, 0
    %v553 = vsel %vm488, 1, 0
    %vm554 = vcmp.eq.s32.totalorder %v538, 1
    %vm555 = vcmp.eq.s32.totalorder %v539, 1
    %vm556 = vcmp.eq.s32.totalorder %v540, 1
    %vm557 = vcmp.eq.s32.totalorder %v541, 1
    %vm558 = vcmp.eq.s32.totalorder %v542, 1
    %vm559 = vcmp.eq.s32.totalorder %v543, 1
    %vm560 = vcmp.eq.s32.totalorder %v544, 1
    %vm561 = vcmp.eq.s32.totalorder %v545, 1
    %vm562 = vcmp.eq.s32.totalorder %v546, 1
    %vm563 = vcmp.eq.s32.totalorder %v547, 1
    %vm564 = vcmp.eq.s32.totalorder %v548, 1
    %vm565 = vcmp.eq.s32.totalorder %v549, 1
    %vm566 = vcmp.eq.s32.totalorder %v550, 1
    %vm567 = vcmp.eq.s32.totalorder %v551, 1
    %vm568 = vcmp.eq.s32.totalorder %v552, 1
    %vm569 = vcmp.eq.s32.totalorder %v553, 1
    %v570 = vsel %vm554, %v537, 0.0
    %v571 = vsel %vm555, %v536, 0.0
    %v572 = vsel %vm556, %v535, 0.0
    %v573 = vsel %vm557, %v534, 0.0
    %v574 = vsel %vm558, %v533, 0.0
    %v575 = vsel %vm559, %v532, 0.0
    %v576 = vsel %vm560, %v531, 0.0
    %v577 = vsel %vm561, %v530, 0.0
    %v578 = vsel %vm562, %v529, 0.0
    %v579 = vsel %vm563, %v528, 0.0
    %v580 = vsel %vm564, %v527, 0.0
    %v581 = vsel %vm565, %v526, 0.0
    %v582 = vsel %vm566, %v525, 0.0
    %v583 = vsel %vm567, %v524, 0.0
    %v584 = vsel %vm568, %v523, 0.0
    %v585 = vsel %vm569, %v522, 0.0
    %v586 = vrot.slane %v248, 1
    %v587 = vrot.slane %v249, 1
    %v588 = vrot.slane %v250, 1
    %v589 = vrot.slane %v251, 1
    %v590 = vrot.slane %v252, 1
    %v591 = vrot.slane %v253, 1
    %v592 = vrot.slane %v254, 1
    %v593 = vrot.slane %v255, 1
    %v594 = vrot.slane %v256, 1
    %v595 = vrot.slane %v257, 1
    %v596 = vrot.slane %v258, 1
    %v597 = vrot.slane %v259, 1
    %v598 = vrot.slane %v260, 1
    %v599 = vrot.slane %v261, 1
    %v600 = vrot.slane %v262, 1
    %v601 = vrot.slane %v263, 1
    %vm602 = vcmp.lt.s32.totalorder %v265, 7
    %v603 = vsel %vm602, %v600, %v601
    %v604 = vsel %vm602, %v599, %v600
    %v605 = vsel %vm602, %v598, %v599
    %v606 = vsel %vm602, %v597, %v598
    %v607 = vsel %vm602, %v596, %v597
    %v608 = vsel %vm602, %v595, %v596
    %v609 = vsel %vm602, %v594, %v595
    %v610 = vsel %vm602, %v593, %v594
    %v611 = vsel %vm602, %v592, %v593
    %v612 = vsel %vm602, %v591, %v592
    %v613 = vsel %vm602, %v590, %v591
    %v614 = vsel %vm602, %v589, %v590
    %v615 = vsel %vm602, %v588, %v589
    %v616 = vsel %vm602, %v587, %v588
    %v617 = vsel %vm602, %v586, %v587
    %v618 = vsel %vm602, %v601, %v586
    %v619 = vsel %vm489, 1, 0
    %v620 = vsel %vm490, 1, 0
    %v621 = vsel %vm491, 1, 0
    %v622 = vsel %vm492, 1, 0
    %v623 = vsel %vm493, 1, 0
    %v624 = vsel %vm494, 1, 0
    %v625 = vsel %vm495, 1, 0
    %v626 = vsel %vm496, 1, 0
    %v627 = vsel %vm497, 1, 0
    %v628 = vsel %vm498, 1, 0
    %v629 = vsel %vm499, 1, 0
    %v630 = vsel %vm500, 1, 0
    %v631 = vsel %vm501, 1, 0
    %v632 = vsel %vm502, 1, 0
    %v633 = vsel %vm503, 1, 0
    %v634 = vsel %vm504, 1, 0
    %vm635 = vcmp.eq.s32.totalorder %v619, 1
    %vm636 = vcmp.eq.s32.totalorder %v620, 1
    %vm637 = vcmp.eq.s32.totalorder %v621, 1
    %vm638 = vcmp.eq.s32.totalorder %v622, 1
    %vm639 = vcmp.eq.s32.totalorder %v623, 1
    %vm640 = vcmp.eq.s32.totalorder %v624, 1
    %vm641 = vcmp.eq.s32.totalorder %v625, 1
    %vm642 = vcmp.eq.s32.totalorder %v626, 1
    %vm643 = vcmp.eq.s32.totalorder %v627, 1
    %vm644 = vcmp.eq.s32.totalorder %v628, 1
    %vm645 = vcmp.eq.s32.totalorder %v629, 1
    %vm646 = vcmp.eq.s32.totalorder %v630, 1
    %vm647 = vcmp.eq.s32.totalorder %v631, 1
    %vm648 = vcmp.eq.s32.totalorder %v632, 1
    %vm649 = vcmp.eq.s32.totalorder %v633, 1
    %vm650 = vcmp.eq.s32.totalorder %v634, 1
    %v651 = vsel %vm635, %v617, 0.0
    %v652 = vsel %vm636, %v616, 0.0
    %v653 = vsel %vm637, %v615, 0.0
    %v654 = vsel %vm638, %v614, 0.0
    %v655 = vsel %vm639, %v613, 0.0
    %v656 = vsel %vm640, %v612, 0.0
    %v657 = vsel %vm641, %v611, 0.0
    %v658 = vsel %vm642, %v610, 0.0
    %v659 = vsel %vm643, %v609, 0.0
    %v660 = vsel %vm644, %v608, 0.0
    %v661 = vsel %vm645, %v607, 0.0
    %v662 = vsel %vm646, %v606, 0.0
    %v663 = vsel %vm647, %v605, 0.0
    %v664 = vsel %vm648, %v604, 0.0
    %v665 = vsel %vm649, %v603, 0.0
    %v666 = vsel %vm650, %v618, 0.0
    %v667 = vld [vmem:[#allocation8] sm:$0xff]
    %v668 = vld [vmem:[#allocation8 + $0x8] sm:$0xff]
    %v669 = vld [vmem:[#allocation8 + $0x10] sm:$0xff]
    %v670 = vld [vmem:[#allocation8 + $0x18] sm:$0xff]
    %v671 = vld [vmem:[#allocation8 + $0x20] sm:$0xff]
    %v672 = vld [vmem:[#allocation8 + $0x28] sm:$0xff]
    %v673 = vld [vmem:[#allocation8 + $0x30] sm:$0xff]
    %v674 = vld [vmem:[#allocation8 + $0x38] sm:$0xff]
    %s675 = scalar_lea.vmem [#allocation8], 64
    %v676 = vld [vmem:[%s675] sm:$0xff]
    %v677 = vld [vmem:[%s675 + $0x8] sm:$0xff]
    %v678 = vld [vmem:[%s675 + $0x10] sm:$0xff]
    %v679 = vld [vmem:[%s675 + $0x18] sm:$0xff]
    %v680 = vld [vmem:[%s675 + $0x20] sm:$0xff]
    %v681 = vld [vmem:[%s675 + $0x28] sm:$0xff]
    %v682 = vld [vmem:[%s675 + $0x30] sm:$0xff]
    %v683 = vld [vmem:[%s675 + $0x38] sm:$0xff]
    %vm684 = vcmask 523264
    %v686 = vsel %vm684, %v248, 0
    %v689 = vsel %vm684, %v249, 0
    %v692 = vsel %vm684, %v250, 0
    %v695 = vsel %vm684, %v251, 0
    %v698 = vsel %vm684, %v252, 0
    %v701 = vsel %vm684, %v253, 0
    %v704 = vsel %vm684, %v254, 0
    %v707 = vsel %vm684, %v255, 0
    %v710 = vsel %vm684, %v256, 0
    %v713 = vsel %vm684, %v257, 0
    %v716 = vsel %vm684, %v258, 0
    %v719 = vsel %vm684, %v259, 0
    %v722 = vsel %vm684, %v260, 0
    %v725 = vsel %vm684, %v261, 0
    %v728 = vsel %vm684, %v262, 0
    %v731 = vsel %vm684, %v263, 0
    %733 = vmatpush.msra.mxu0 0.0
    %734 = vmatpush.msra.mxu0 0.0
    %735 = vmatpush.msra.mxu0 0.0
    %736 = vmatpush.msra.mxu0 0.0
    %737 = vmatpush.msra.mxu0 0.0
    %738 = vmatpush.msra.mxu0 0.0
    %739 = vmatpush.msra.mxu0 0.0
    %740 = vmatpush.msra.mxu0 0.0
    %741 = vmatpush.msra.mxu0 %v683
    %742 = vmatpush.msra.mxu0 %v682
    %743 = vmatpush.msra.mxu0 %v681
    %744 = vmatpush.msra.mxu0 %v680
    %745 = vmatpush.msra.mxu0 %v679
    %746 = vmatpush.msra.mxu0 %v678
    %747 = vmatpush.msra.mxu0 %v677
    %748 = vmatpush.msra.mxu0 %v676
    %749 = vmatmul.f32.gmra.mxu0 %v686
    %v750 = vpop.f32.mrf.mxu0
    %v751 = vadd.f32 0.0, %v750
    %752 = vmatmul.f32.gmra.mxu0 %v689
    %v753 = vpop.f32.mrf.mxu0
    %v754 = vadd.f32 0.0, %v753
    %755 = vmatmul.f32.gmra.mxu0 %v692
    %v756 = vpop.f32.mrf.mxu0
    %v757 = vadd.f32 0.0, %v756
    %758 = vmatmul.f32.gmra.mxu0 %v695
    %v759 = vpop.f32.mrf.mxu0
    %v760 = vadd.f32 0.0, %v759
    %761 = vmatmul.f32.gmra.mxu0 %v698
    %v762 = vpop.f32.mrf.mxu0
    %v763 = vadd.f32 0.0, %v762
    %764 = vmatmul.f32.gmra.mxu0 %v701
    %v765 = vpop.f32.mrf.mxu0
    %v766 = vadd.f32 0.0, %v765
    %767 = vmatmul.f32.gmra.mxu0 %v704
    %v768 = vpop.f32.mrf.mxu0
    %v769 = vadd.f32 0.0, %v768
    %770 = vmatmul.f32.gmra.mxu0 %v707
    %v771 = vpop.f32.mrf.mxu0
    %v772 = vadd.f32 0.0, %v771
    %773 = vmatmul.f32.gmra.mxu0 %v710
    %v774 = vpop.f32.mrf.mxu0
    %v775 = vadd.f32 0.0, %v774
    %776 = vmatmul.f32.gmra.mxu0 %v713
    %v777 = vpop.f32.mrf.mxu0
    %v778 = vadd.f32 0.0, %v777
    %779 = vmatmul.f32.gmra.mxu0 %v716
    %v780 = vpop.f32.mrf.mxu0
    %v781 = vadd.f32 0.0, %v780
    %782 = vmatmul.f32.gmra.mxu0 %v719
    %v783 = vpop.f32.mrf.mxu0
    %v784 = vadd.f32 0.0, %v783
    %785 = vmatmul.f32.gmra.mxu0 %v722
    %v786 = vpop.f32.mrf.mxu0
    %v787 = vadd.f32 0.0, %v786
    %788 = vmatmul.f32.gmra.mxu0 %v725
    %v789 = vpop.f32.mrf.mxu0
    %v790 = vadd.f32 0.0, %v789
    %791 = vmatmul.f32.gmra.mxu0 %v728
    %v792 = vpop.f32.mrf.mxu0
    %v793 = vadd.f32 0.0, %v792
    %794 = vmatmul.f32.gmra.mxu0 %v731
    %v795 = vpop.f32.mrf.mxu0
    %v796 = vadd.f32 0.0, %v795
    %797 = vdwg.mxu0
    %v799 = vsel %vm684, %v570, 0
    %v802 = vsel %vm684, %v571, 0
    %v805 = vsel %vm684, %v572, 0
    %v808 = vsel %vm684, %v573, 0
    %v811 = vsel %vm684, %v574, 0
    %v814 = vsel %vm684, %v575, 0
    %v817 = vsel %vm684, %v576, 0
    %v820 = vsel %vm684, %v577, 0
    %v823 = vsel %vm684, %v578, 0
    %v826 = vsel %vm684, %v579, 0
    %v829 = vsel %vm684, %v580, 0
    %v832 = vsel %vm684, %v581, 0
    %v835 = vsel %vm684, %v582, 0
    %v838 = vsel %vm684, %v583, 0
    %v841 = vsel %vm684, %v584, 0
    %v844 = vsel %vm684, %v585, 0
    %846 = vmatpush.msra.mxu0 0.0
    %847 = vmatpush.msra.mxu0 0.0
    %848 = vmatpush.msra.mxu0 0.0
    %849 = vmatpush.msra.mxu0 0.0
    %850 = vmatpush.msra.mxu0 0.0
    %851 = vmatpush.msra.mxu0 0.0
    %852 = vmatpush.msra.mxu0 0.0
    %853 = vmatpush.msra.mxu0 0.0
    %854 = vmatpush.msra.mxu0 %v674
    %855 = vmatpush.msra.mxu0 %v673
    %856 = vmatpush.msra.mxu0 %v672
    %857 = vmatpush.msra.mxu0 %v671
    %858 = vmatpush.msra.mxu0 %v670
    %859 = vmatpush.msra.mxu0 %v669
    %860 = vmatpush.msra.mxu0 %v668
    %861 = vmatpush.msra.mxu0 %v667
    %862 = vmatmul.f32.gmra.mxu0 %v799
    %v863 = vpop.f32.mrf.mxu0
    %v864 = vadd.f32 %v751, %v863
    %865 = vmatmul.f32.gmra.mxu0 %v802
    %v866 = vpop.f32.mrf.mxu0
    %v867 = vadd.f32 %v754, %v866
    %868 = vmatmul.f32.gmra.mxu0 %v805
    %v869 = vpop.f32.mrf.mxu0
    %v870 = vadd.f32 %v757, %v869
    %871 = vmatmul.f32.gmra.mxu0 %v808
    %v872 = vpop.f32.mrf.mxu0
    %v873 = vadd.f32 %v760, %v872
    %874 = vmatmul.f32.gmra.mxu0 %v811
    %v875 = vpop.f32.mrf.mxu0
    %v876 = vadd.f32 %v763, %v875
    %877 = vmatmul.f32.gmra.mxu0 %v814
    %v878 = vpop.f32.mrf.mxu0
    %v879 = vadd.f32 %v766, %v878
    %880 = vmatmul.f32.gmra.mxu0 %v817
    %v881 = vpop.f32.mrf.mxu0
    %v882 = vadd.f32 %v769, %v881
    %883 = vmatmul.f32.gmra.mxu0 %v820
    %v884 = vpop.f32.mrf.mxu0
    %v885 = vadd.f32 %v772, %v884
    %886 = vmatmul.f32.gmra.mxu0 %v823
    %v887 = vpop.f32.mrf.mxu0
    %v888 = vadd.f32 %v775, %v887
    %889 = vmatmul.f32.gmra.mxu0 %v826
    %v890 = vpop.f32.mrf.mxu0
    %v891 = vadd.f32 %v778, %v890
    %892 = vmatmul.f32.gmra.mxu0 %v829
    %v893 = vpop.f32.mrf.mxu0
    %v894 = vadd.f32 %v781, %v893
    %895 = vmatmul.f32.gmra.mxu0 %v832
    %v896 = vpop.f32.mrf.mxu0
    %v897 = vadd.f32 %v784, %v896
    %898 = vmatmul.f32.gmra.mxu0 %v835
    %v899 = vpop.f32.mrf.mxu0
    %v900 = vadd.f32 %v787, %v899
    %901 = vmatmul.f32.gmra.mxu0 %v838
    %v902 = vpop.f32.mrf.mxu0
    %v903 = vadd.f32 %v790, %v902
    %904 = vmatmul.f32.gmra.mxu0 %v841
    %v905 = vpop.f32.mrf.mxu0
    %v906 = vadd.f32 %v793, %v905
    %907 = vmatmul.f32.gmra.mxu0 %v844
    %v908 = vpop.f32.mrf.mxu0
    %v909 = vadd.f32 %v796, %v908
    %910 = vdwg.mxu0
    %s911 = scalar_lea.vmem [#allocation8], 128
    %v912 = vld [vmem:[%s911] sm:$0xff]
    %v913 = vld [vmem:[%s911 + $0x8] sm:$0xff]
    %v914 = vld [vmem:[%s911 + $0x10] sm:$0xff]
    %v915 = vld [vmem:[%s911 + $0x18] sm:$0xff]
    %v916 = vld [vmem:[%s911 + $0x20] sm:$0xff]
    %v917 = vld [vmem:[%s911 + $0x28] sm:$0xff]
    %v918 = vld [vmem:[%s911 + $0x30] sm:$0xff]
    %v919 = vld [vmem:[%s911 + $0x38] sm:$0xff]
    %v921 = vsel %vm684, %v651, 0
    %v924 = vsel %vm684, %v652, 0
    %v927 = vsel %vm684, %v653, 0
    %v930 = vsel %vm684, %v654, 0
    %v933 = vsel %vm684, %v655, 0
    %v936 = vsel %vm684, %v656, 0
    %v939 = vsel %vm684, %v657, 0
    %v942 = vsel %vm684, %v658, 0
    %v945 = vsel %vm684, %v659, 0
    %v948 = vsel %vm684, %v660, 0
    %v951 = vsel %vm684, %v661, 0
    %v954 = vsel %vm684, %v662, 0
    %v957 = vsel %vm684, %v663, 0
    %v960 = vsel %vm684, %v664, 0
    %v963 = vsel %vm684, %v665, 0
    %v966 = vsel %vm684, %v666, 0
    %968 = vmatpush.msra.mxu0 0.0
    %969 = vmatpush.msra.mxu0 0.0
    %970 = vmatpush.msra.mxu0 0.0
    %971 = vmatpush.msra.mxu0 0.0
    %972 = vmatpush.msra.mxu0 0.0
    %973 = vmatpush.msra.mxu0 0.0
    %974 = vmatpush.msra.mxu0 0.0
    %975 = vmatpush.msra.mxu0 0.0
    %976 = vmatpush.msra.mxu0 %v919
    %977 = vmatpush.msra.mxu0 %v918
    %978 = vmatpush.msra.mxu0 %v917
    %979 = vmatpush.msra.mxu0 %v916
    %980 = vmatpush.msra.mxu0 %v915
    %981 = vmatpush.msra.mxu0 %v914
    %982 = vmatpush.msra.mxu0 %v913
    %983 = vmatpush.msra.mxu0 %v912
    %984 = vmatmul.f32.gmra.mxu0 %v921
    %v985 = vpop.f32.mrf.mxu0
    %v986 = vadd.f32 0.0, %v985
    %987 = vmatmul.f32.gmra.mxu0 %v924
    %v988 = vpop.f32.mrf.mxu0
    %v989 = vadd.f32 0.0, %v988
    %990 = vmatmul.f32.gmra.mxu0 %v927
    %v991 = vpop.f32.mrf.mxu0
    %v992 = vadd.f32 0.0, %v991
    %993 = vmatmul.f32.gmra.mxu0 %v930
    %v994 = vpop.f32.mrf.mxu0
    %v995 = vadd.f32 0.0, %v994
    %996 = vmatmul.f32.gmra.mxu0 %v933
    %v997 = vpop.f32.mrf.mxu0
    %v998 = vadd.f32 0.0, %v997
    %999 = vmatmul.f32.gmra.mxu0 %v936
    %v1000 = vpop.f32.mrf.mxu0
    %v1001 = vadd.f32 0.0, %v1000
    %1002 = vmatmul.f32.gmra.mxu0 %v939
    %v1003 = vpop.f32.mrf.mxu0
    %v1004 = vadd.f32 0.0, %v1003
    %1005 = vmatmul.f32.gmra.mxu0 %v942
    %v1006 = vpop.f32.mrf.mxu0
    %v1007 = vadd.f32 0.0, %v1006
    %1008 = vmatmul.f32.gmra.mxu0 %v945
    %v1009 = vpop.f32.mrf.mxu0
    %v1010 = vadd.f32 0.0, %v1009
    %1011 = vmatmul.f32.gmra.mxu0 %v948
    %v1012 = vpop.f32.mrf.mxu0
    %v1013 = vadd.f32 0.0, %v1012
    %1014 = vmatmul.f32.gmra.mxu0 %v951
    %v1015 = vpop.f32.mrf.mxu0
    %v1016 = vadd.f32 0.0, %v1015
    %1017 = vmatmul.f32.gmra.mxu0 %v954
    %v1018 = vpop.f32.mrf.mxu0
    %v1019 = vadd.f32 0.0, %v1018
    %1020 = vmatmul.f32.gmra.mxu0 %v957
    %v1021 = vpop.f32.mrf.mxu0
    %v1022 = vadd.f32 0.0, %v1021
    %1023 = vmatmul.f32.gmra.mxu0 %v960
    %v1024 = vpop.f32.mrf.mxu0
    %v1025 = vadd.f32 0.0, %v1024
    %1026 = vmatmul.f32.gmra.mxu0 %v963
    %v1027 = vpop.f32.mrf.mxu0
    %v1028 = vadd.f32 0.0, %v1027
    %1029 = vmatmul.f32.gmra.mxu0 %v966
    %v1030 = vpop.f32.mrf.mxu0
    %v1031 = vadd.f32 0.0, %v1030
    %1032 = vdwg.mxu0
    %v1033 = vadd.f32 %v864, %v986
    %v1034 = vadd.f32 %v867, %v989
    %v1035 = vadd.f32 %v870, %v992
    %v1036 = vadd.f32 %v873, %v995
    %v1037 = vadd.f32 %v876, %v998
    %v1038 = vadd.f32 %v879, %v1001
    %v1039 = vadd.f32 %v882, %v1004
    %v1040 = vadd.f32 %v885, %v1007
    %v1041 = vadd.f32 %v888, %v1010
    %v1042 = vadd.f32 %v891, %v1013
    %v1043 = vadd.f32 %v894, %v1016
    %v1044 = vadd.f32 %v897, %v1019
    %v1045 = vadd.f32 %v900, %v1022
    %v1046 = vadd.f32 %v903, %v1025
    %v1047 = vadd.f32 %v906, %v1028
    %v1048 = vadd.f32 %v909, %v1031
    %v1049 = vld [vmem:[%s4] sm:$0x1]
    %v1051 = vperm.slane %v1049, 0
    %v1053 = vadd.f32 %v1033, %v1051
    %v1054 = vadd.f32 %v1034, %v1051
    %v1055 = vadd.f32 %v1035, %v1051
    %v1056 = vadd.f32 %v1036, %v1051
    %v1057 = vadd.f32 %v1037, %v1051
    %v1058 = vadd.f32 %v1038, %v1051
    %v1059 = vadd.f32 %v1039, %v1051
    %v1060 = vadd.f32 %v1040, %v1051
    %v1061 = vadd.f32 %v1041, %v1051
    %v1062 = vadd.f32 %v1042, %v1051
    %v1063 = vadd.f32 %v1043, %v1051
    %v1064 = vadd.f32 %v1044, %v1051
    %v1065 = vadd.f32 %v1045, %v1051
    %v1066 = vadd.f32 %v1046, %v1051
    %v1067 = vadd.f32 %v1047, %v1051
    %v1068 = vadd.f32 %v1048, %v1051
    %v1069 = vmax.f32 %v1053, 0.0
    %v1070 = vmax.f32 %v1054, 0.0
    %v1071 = vmax.f32 %v1055, 0.0
    %v1072 = vmax.f32 %v1056, 0.0
    %v1073 = vmax.f32 %v1057, 0.0
    %v1074 = vmax.f32 %v1058, 0.0
    %v1075 = vmax.f32 %v1059, 0.0
    %v1076 = vmax.f32 %v1060, 0.0
    %v1077 = vmax.f32 %v1061, 0.0
    %v1078 = vmax.f32 %v1062, 0.0
    %v1079 = vmax.f32 %v1063, 0.0
    %v1080 = vmax.f32 %v1064, 0.0
    %v1081 = vmax.f32 %v1065, 0.0
    %v1082 = vmax.f32 %v1066, 0.0
    %v1083 = vmax.f32 %v1067, 0.0
    %v1084 = vmax.f32 %v1068, 0.0
    %v1093 = vrot.slane %v1069, 1
    %v1094 = vrot.slane %v1071, 1
    %v1095 = vrot.slane %v1073, 1
    %v1096 = vrot.slane %v1075, 1
    %v1097 = vrot.slane %v1077, 1
    %v1098 = vrot.slane %v1079, 1
    %v1099 = vrot.slane %v1081, 1
    %v1100 = vrot.slane %v1083, 1
    %v1109 = vmax.f32 %v1069, %v1093
    %v1110 = vmax.f32 %v1071, %v1094
    %v1111 = vmax.f32 %v1073, %v1095
    %v1112 = vmax.f32 %v1075, %v1096
    %v1113 = vmax.f32 %v1077, %v1097
    %v1114 = vmax.f32 %v1079, %v1098
    %v1115 = vmax.f32 %v1081, %v1099
    %v1116 = vmax.f32 %v1083, %v1100
    %v1125 = vrot.slane %v1110, 7
    %vm1126 = vcmask 1041409
    %v1127 = vsel %vm1126, %v1125, %v1109
    %v1128 = vrot.slane %v1111, 6
    %vm1129 = vcmask 1042434
    %v1130 = vsel %vm1129, %v1128, %v1127
    %v1131 = vrot.slane %v1112, 5
    %vm1132 = vcmask 1043459
    %v1133 = vsel %vm1132, %v1131, %v1130
    %v1134 = vrot.slane %v1113, 4
    %vm1135 = vcmask 1044484
    %v1136 = vsel %vm1135, %v1134, %v1133
    %v1137 = vrot.slane %v1114, 3
    %vm1138 = vcmask 1045509
    %v1139 = vsel %vm1138, %v1137, %v1136
    %v1140 = vrot.slane %v1115, 2
    %vm1141 = vcmask 1046534
    %v1142 = vsel %vm1141, %v1140, %v1139
    %v1143 = vrot.slane %v1116, 1
    %vm1144 = vcmask 1047559
    %v1145 = vsel %vm1144, %v1143, %v1142
    %v1147 = vrot.slane %v1109, 2
    %v1148 = vrot.slane %v1110, 1
    %v1149 = vsel %vm1126, %v1148, %v1147
    %v1150 = vsel %vm1129, %v1111, %v1149
    %v1151 = vrot.slane %v1112, 7
    %v1152 = vsel %vm1132, %v1151, %v1150
    %v1153 = vrot.slane %v1113, 6
    %v1154 = vsel %vm1135, %v1153, %v1152
    %v1155 = vrot.slane %v1114, 5
    %v1156 = vsel %vm1138, %v1155, %v1154
    %v1157 = vrot.slane %v1115, 4
    %v1158 = vsel %vm1141, %v1157, %v1156
    %v1159 = vrot.slane %v1116, 3
    %v1160 = vsel %vm1144, %v1159, %v1158
    %1161 = vrot.lane.b32.xlu0 %v1160, 64
    %v1162 = vpop.permute.xlu0 %1161
    %v1164 = vsel %vm684, %v1145, %v1162
    %1165 = vst [vmem:[#allocation2] sm:$0xff] %v1164
    %v1166 = vsel %vm1138, %v1125, %v1109
    %v1167 = vsel %vm1141, %v1128, %v1166
    %v1168 = vsel %vm1144, %v1131, %v1167
    %v1169 = vsel %vm1126, %v1137, %v1134
    %v1170 = vsel %vm1129, %v1140, %v1169
    %v1171 = vsel %vm1132, %v1143, %v1170
    %v1174 = vsel %vm1138, %v1148, %v1147
    %v1175 = vsel %vm1141, %v1111, %v1174
    %v1176 = vsel %vm1144, %v1151, %v1175
    %v1177 = vsel %vm1126, %v1155, %v1153
    %v1178 = vsel %vm1129, %v1157, %v1177
    %v1179 = vsel %vm1132, %v1159, %v1178
    %1180 = vrot.lane.b32.xlu0 %v1176, 64
    %v1181 = vpop.permute.xlu0 %1180
    %1182 = vrot.lane.b32.xlu0 %v1179, 64
    %v1183 = vpop.permute.xlu0 %1182
    %v1186 = vsel %vm684, %v1168, %v1181
    %v1187 = vsel %vm684, %v1171, %v1183
    %vm1190 = vcmask 1043456
    %v1191 = vrot.slane %v1186, 4
    %v1192 = vrot.slane %v1187, 4
    %v1193 = vsel %vm1190, %v1191, %v1192
    %1195 = vst [vmem:[#allocation2 + $0x8] sm:$0xff] %v1193
    %v1204 = vrot.slane %v1070, 1
    %v1205 = vrot.slane %v1072, 1
    %v1206 = vrot.slane %v1074, 1
    %v1207 = vrot.slane %v1076, 1
    %v1208 = vrot.slane %v1078, 1
    %v1209 = vrot.slane %v1080, 1
    %v1210 = vrot.slane %v1082, 1
    %v1211 = vrot.slane %v1084, 1
    %v1220 = vmax.f32 %v1070, %v1204
    %v1221 = vmax.f32 %v1072, %v1205
    %v1222 = vmax.f32 %v1074, %v1206
    %v1223 = vmax.f32 %v1076, %v1207
    %v1224 = vmax.f32 %v1078, %v1208
    %v1225 = vmax.f32 %v1080, %v1209
    %v1226 = vmax.f32 %v1082, %v1210
    %v1227 = vmax.f32 %v1084, %v1211
    %v1236 = vrot.slane %v1221, 7
    %v1237 = vsel %vm1126, %v1236, %v1220
    %v1238 = vrot.slane %v1222, 6
    %v1239 = vsel %vm1129, %v1238, %v1237
    %v1240 = vrot.slane %v1223, 5
    %v1241 = vsel %vm1132, %v1240, %v1239
    %v1242 = vrot.slane %v1224, 4
    %v1243 = vsel %vm1135, %v1242, %v1241
    %v1244 = vrot.slane %v1225, 3
    %v1245 = vsel %vm1138, %v1244, %v1243
    %v1246 = vrot.slane %v1226, 2
    %v1247 = vsel %vm1141, %v1246, %v1245
    %v1248 = vrot.slane %v1227, 1
    %v1249 = vsel %vm1144, %v1248, %v1247
    %v1251 = vrot.slane %v1220, 2
    %v1252 = vrot.slane %v1221, 1
    %v1253 = vsel %vm1126, %v1252, %v1251
    %v1254 = vsel %vm1129, %v1222, %v1253
    %v1255 = vrot.slane %v1223, 7
    %v1256 = vsel %vm1132, %v1255, %v1254
    %v1257 = vrot.slane %v1224, 6
    %v1258 = vsel %vm1135, %v1257, %v1256
    %v1259 = vrot.slane %v1225, 5
    %v1260 = vsel %vm1138, %v1259, %v1258
    %v1261 = vrot.slane %v1226, 4
    %v1262 = vsel %vm1141, %v1261, %v1260
    %v1263 = vrot.slane %v1227, 3
    %v1264 = vsel %vm1144, %v1263, %v1262
    %1265 = vrot.lane.b32.xlu0 %v1264, 64
    %v1266 = vpop.permute.xlu0 %1265
    %v1268 = vsel %vm684, %v1249, %v1266
    %1269 = vst [vmem:[#allocation2 + $0x10] sm:$0xff] %v1268
    %v1270 = vsel %vm1138, %v1236, %v1220
    %v1271 = vsel %vm1141, %v1238, %v1270
    %v1272 = vsel %vm1144, %v1240, %v1271
    %v1273 = vsel %vm1126, %v1244, %v1242
    %v1274 = vsel %vm1129, %v1246, %v1273
    %v1275 = vsel %vm1132, %v1248, %v1274
    %v1278 = vsel %vm1138, %v1252, %v1251
    %v1279 = vsel %vm1141, %v1222, %v1278
    %v1280 = vsel %vm1144, %v1255, %v1279
    %v1281 = vsel %vm1126, %v1259, %v1257
    %v1282 = vsel %vm1129, %v1261, %v1281
    %v1283 = vsel %vm1132, %v1263, %v1282
    %1284 = vrot.lane.b32.xlu0 %v1280, 64
    %v1285 = vpop.permute.xlu0 %1284
    %1286 = vrot.lane.b32.xlu0 %v1283, 64
    %v1287 = vpop.permute.xlu0 %1286
    %v1290 = vsel %vm684, %v1272, %v1285
    %v1291 = vsel %vm684, %v1275, %v1287
    %v1294 = vrot.slane %v1290, 4
    %v1295 = vrot.slane %v1291, 4
    %v1296 = vsel %vm1190, %v1294, %v1295
    %1298 = vst [vmem:[#allocation2 + $0x18] sm:$0xff] %v1296
    %v1299 = vld [vmem:[#allocation2] sm:$0xff]
    %v1300 = vld [vmem:[#allocation2 + $0x8] sm:$0xff]
    %v1301 = vld [vmem:[#allocation2 + $0x10] sm:$0xff]
    %v1302 = vld [vmem:[#allocation2 + $0x18] sm:$0xff]
    %v1303 = vld [vmem:[#allocation9] sm:$0xff]
    %v1304 = vld [vmem:[#allocation9 + $0x8] sm:$0xff]
    %v1305 = vld [vmem:[#allocation9 + $0x10] sm:$0xff]
    %v1306 = vld [vmem:[#allocation9 + $0x18] sm:$0xff]
    %v1307 = vld [vmem:[#allocation9 + $0x20] sm:$0xff]
    %v1308 = vld [vmem:[#allocation9 + $0x28] sm:$0xff]
    %v1309 = vld [vmem:[#allocation9 + $0x30] sm:$0xff]
    %v1310 = vld [vmem:[#allocation9 + $0x38] sm:$0xff]
    %v1311 = vld [vmem:[#allocation9 + $0x40] sm:$0xff]
    %v1312 = vld [vmem:[#allocation9 + $0x48] sm:$0xff]
    %v1313 = vld [vmem:[#allocation9 + $0x50] sm:$0xff]
    %v1314 = vld [vmem:[#allocation9 + $0x58] sm:$0xff]
    %v1315 = vld [vmem:[#allocation9 + $0x60] sm:$0xff]
    %v1316 = vld [vmem:[#allocation9 + $0x68] sm:$0xff]
    %v1317 = vld [vmem:[#allocation9 + $0x70] sm:$0xff]
    %v1318 = vld [vmem:[#allocation9 + $0x78] sm:$0xff]
    %v1319 = vld [vmem:[#allocation9 + $0x80] sm:$0xff]
    %v1320 = vld [vmem:[#allocation9 + $0x88] sm:$0xff]
    %v1321 = vld [vmem:[#allocation9 + $0x90] sm:$0xff]
    %v1322 = vld [vmem:[#allocation9 + $0x98] sm:$0xff]
    %v1323 = vld [vmem:[#allocation9 + $0xa0] sm:$0xff]
    %v1324 = vld [vmem:[#allocation9 + $0xa8] sm:$0xff]
    %v1325 = vld [vmem:[#allocation9 + $0xb0] sm:$0xff]
    %v1326 = vld [vmem:[#allocation9 + $0xb8] sm:$0xff]
    %v1327 = vld [vmem:[#allocation9 + $0xc0] sm:$0xff]
    %v1328 = vld [vmem:[#allocation9 + $0xc8] sm:$0xff]
    %v1329 = vld [vmem:[#allocation9 + $0xd0] sm:$0xff]
    %v1330 = vld [vmem:[#allocation9 + $0xd8] sm:$0xff]
    %v1331 = vld [vmem:[#allocation9 + $0xe0] sm:$0xff]
    %v1332 = vld [vmem:[#allocation9 + $0xe8] sm:$0xff]
    %v1333 = vld [vmem:[#allocation9 + $0xf0] sm:$0xff]
    %v1334 = vld [vmem:[#allocation9 + $0xf8] sm:$0xff]
    %v1335 = vld [vmem:[#allocation9 + $0x100] sm:$0xff]
    %v1336 = vld [vmem:[#allocation9 + $0x108] sm:$0xff]
    %v1337 = vld [vmem:[#allocation9 + $0x110] sm:$0xff]
    %v1338 = vld [vmem:[#allocation9 + $0x118] sm:$0xff]
    %v1339 = vld [vmem:[#allocation9 + $0x120] sm:$0xff]
    %v1340 = vld [vmem:[#allocation9 + $0x128] sm:$0xff]
    %v1341 = vld [vmem:[#allocation9 + $0x130] sm:$0xff]
    %v1342 = vld [vmem:[#allocation9 + $0x138] sm:$0xff]
    %v1343 = vld [vmem:[#allocation9 + $0x140] sm:$0xff]
    %v1344 = vld [vmem:[#allocation9 + $0x148] sm:$0xff]
    %v1345 = vld [vmem:[#allocation9 + $0x150] sm:$0xff]
    %v1346 = vld [vmem:[#allocation9 + $0x158] sm:$0xff]
    %v1347 = vld [vmem:[#allocation9 + $0x160] sm:$0xff]
    %v1348 = vld [vmem:[#allocation9 + $0x168] sm:$0xff]
    %v1349 = vld [vmem:[#allocation9 + $0x170] sm:$0xff]
    %v1350 = vld [vmem:[#allocation9 + $0x178] sm:$0xff]
    %v1351 = vld [vmem:[#allocation9 + $0x180] sm:$0xff]
    %v1352 = vld [vmem:[#allocation9 + $0x188] sm:$0xff]
    %v1353 = vld [vmem:[#allocation9 + $0x190] sm:$0xff]
    %v1354 = vld [vmem:[#allocation9 + $0x198] sm:$0xff]
    %v1355 = vld [vmem:[#allocation9 + $0x1a0] sm:$0xff]
    %v1356 = vld [vmem:[#allocation9 + $0x1a8] sm:$0xff]
    %v1357 = vld [vmem:[#allocation9 + $0x1b0] sm:$0xff]
    %v1358 = vld [vmem:[#allocation9 + $0x1b8] sm:$0xff]
    %v1359 = vld [vmem:[#allocation9 + $0x1c0] sm:$0xff]
    %v1360 = vld [vmem:[#allocation9 + $0x1c8] sm:$0xff]
    %v1361 = vld [vmem:[#allocation9 + $0x1d0] sm:$0xff]
    %v1362 = vld [vmem:[#allocation9 + $0x1d8] sm:$0xff]
    %v1363 = vld [vmem:[#allocation9 + $0x1e0] sm:$0xff]
    %v1364 = vld [vmem:[#allocation9 + $0x1e8] sm:$0xff]
    %v1365 = vld [vmem:[#allocation9 + $0x1f0] sm:$0xff]
    %v1366 = vld [vmem:[#allocation9 + $0x1f8] sm:$0xff]
    %v1367 = vld [vmem:[%s6] sm:$0x1]
    %v1369 = vperm.slane %v1367, 0
    %1371 = vmatpush.msra.mxu0 %v1318
    %1372 = vmatpush.msra.mxu0 %v1317
    %1373 = vmatpush.msra.mxu0 %v1316
    %1374 = vmatpush.msra.mxu0 %v1315
    %1375 = vmatpush.msra.mxu0 %v1314
    %1376 = vmatpush.msra.mxu0 %v1313
    %1377 = vmatpush.msra.mxu0 %v1312
    %1378 = vmatpush.msra.mxu0 %v1311
    %1379 = vmatpush.msra.mxu0 %v1310
    %1380 = vmatpush.msra.mxu0 %v1309
    %1381 = vmatpush.msra.mxu0 %v1308
    %1382 = vmatpush.msra.mxu0 %v1307
    %1383 = vmatpush.msra.mxu0 %v1306
    %1384 = vmatpush.msra.mxu0 %v1305
    %1385 = vmatpush.msra.mxu0 %v1304
    %1386 = vmatpush.msra.mxu0 %v1303
    %1387 = vmatmul.f32.gmra.mxu0 %v1299
    %v1388 = vpop.f32.mrf.mxu0
    %v1389 = vadd.f32 %v1369, %v1388
    %1390 = vdwg.mxu0
    %1391 = vmatpush.msra.mxu0 %v1334
    %1392 = vmatpush.msra.mxu0 %v1333
    %1393 = vmatpush.msra.mxu0 %v1332
    %1394 = vmatpush.msra.mxu0 %v1331
    %1395 = vmatpush.msra.mxu0 %v1330
    %1396 = vmatpush.msra.mxu0 %v1329
    %1397 = vmatpush.msra.mxu0 %v1328
    %1398 = vmatpush.msra.mxu0 %v1327
    %1399 = vmatpush.msra.mxu0 %v1326
    %1400 = vmatpush.msra.mxu0 %v1325
    %1401 = vmatpush.msra.mxu0 %v1324
    %1402 = vmatpush.msra.mxu0 %v1323
    %1403 = vmatpush.msra.mxu0 %v1322
    %1404 = vmatpush.msra.mxu0 %v1321
    %1405 = vmatpush.msra.mxu0 %v1320
    %1406 = vmatpush.msra.mxu0 %v1319
    %1407 = vmatmul.f32.gmra.mxu0 %v1300
    %v1408 = vpop.f32.mrf.mxu0
    %v1409 = vadd.f32 %v1389, %v1408
    %1410 = vdwg.mxu0
    %1411 = vmatpush.msra.mxu0 %v1350
    %1412 = vmatpush.msra.mxu0 %v1349
    %1413 = vmatpush.msra.mxu0 %v1348
    %1414 = vmatpush.msra.mxu0 %v1347
    %1415 = vmatpush.msra.mxu0 %v1346
    %1416 = vmatpush.msra.mxu0 %v1345
    %1417 = vmatpush.msra.mxu0 %v1344
    %1418 = vmatpush.msra.mxu0 %v1343
    %1419 = vmatpush.msra.mxu0 %v1342
    %1420 = vmatpush.msra.mxu0 %v1341
    %1421 = vmatpush.msra.mxu0 %v1340
    %1422 = vmatpush.msra.mxu0 %v1339
    %1423 = vmatpush.msra.mxu0 %v1338
    %1424 = vmatpush.msra.mxu0 %v1337
    %1425 = vmatpush.msra.mxu0 %v1336
    %1426 = vmatpush.msra.mxu0 %v1335
    %1427 = vmatmul.f32.gmra.mxu0 %v1301
    %v1428 = vpop.f32.mrf.mxu0
    %v1429 = vadd.f32 %v1409, %v1428
    %1430 = vdwg.mxu0
    %1431 = vmatpush.msra.mxu0 %v1366
    %1432 = vmatpush.msra.mxu0 %v1365
    %1433 = vmatpush.msra.mxu0 %v1364
    %1434 = vmatpush.msra.mxu0 %v1363
    %1435 = vmatpush.msra.mxu0 %v1362
    %1436 = vmatpush.msra.mxu0 %v1361
    %1437 = vmatpush.msra.mxu0 %v1360
    %1438 = vmatpush.msra.mxu0 %v1359
    %1439 = vmatpush.msra.mxu0 %v1358
    %1440 = vmatpush.msra.mxu0 %v1357
    %1441 = vmatpush.msra.mxu0 %v1356
    %1442 = vmatpush.msra.mxu0 %v1355
    %1443 = vmatpush.msra.mxu0 %v1354
    %1444 = vmatpush.msra.mxu0 %v1353
    %1445 = vmatpush.msra.mxu0 %v1352
    %1446 = vmatpush.msra.mxu0 %v1351
    %1447 = vmatmul.f32.gmra.mxu0 %v1302
    %v1448 = vpop.f32.mrf.mxu0
    %v1449 = vadd.f32 %v1429, %v1448
    %1450 = vdwg.mxu0
    %v1451 = vmax.f32 %v1449, 0.0
    %v1452 = vld [vmem:[#allocation11] sm:$0xff]
    %v1453 = vld [vmem:[#allocation11 + $0x8] sm:$0xff]
    %v1454 = vld [vmem:[#allocation11 + $0x10] sm:$0xff]
    %v1455 = vld [vmem:[#allocation11 + $0x18] sm:$0xff]
    %v1456 = vld [vmem:[#allocation11 + $0x20] sm:$0xff]
    %v1457 = vld [vmem:[#allocation11 + $0x28] sm:$0xff]
    %v1458 = vld [vmem:[#allocation11 + $0x30] sm:$0xff]
    %v1459 = vld [vmem:[#allocation11 + $0x38] sm:$0xff]
    %v1460 = vld [vmem:[#allocation11 + $0x40] sm:$0xff]
    %v1461 = vld [vmem:[#allocation11 + $0x48] sm:$0xff]
    %v1462 = vld [vmem:[#allocation11 + $0x50] sm:$0xff]
    %v1463 = vld [vmem:[#allocation11 + $0x58] sm:$0xff]
    %v1464 = vld [vmem:[#allocation11 + $0x60] sm:$0xff]
    %v1465 = vld [vmem:[#allocation11 + $0x68] sm:$0xff]
    %v1466 = vld [vmem:[#allocation11 + $0x70] sm:$0xff]
    %v1467 = vld [vmem:[#allocation11 + $0x78] sm:$0xff]
    %v1468 = vld [vmem:[%s8] sm:$0x1]
    %v1470 = vperm.slane %v1468, 0
    %1472 = vmatpush.msra.mxu0 %v1467
    %1473 = vmatpush.msra.mxu0 %v1466
    %1474 = vmatpush.msra.mxu0 %v1465
    %1475 = vmatpush.msra.mxu0 %v1464
    %1476 = vmatpush.msra.mxu0 %v1463
    %1477 = vmatpush.msra.mxu0 %v1462
    %1478 = vmatpush.msra.mxu0 %v1461
    %1479 = vmatpush.msra.mxu0 %v1460
    %1480 = vmatpush.msra.mxu0 %v1459
    %1481 = vmatpush.msra.mxu0 %v1458
    %1482 = vmatpush.msra.mxu0 %v1457
    %1483 = vmatpush.msra.mxu0 %v1456
    %1484 = vmatpush.msra.mxu0 %v1455
    %1485 = vmatpush.msra.mxu0 %v1454
    %1486 = vmatpush.msra.mxu0 %v1453
    %1487 = vmatpush.msra.mxu0 %v1452
    %1488 = vmatmul.f32.gmra.mxu0 %v1451
    %v1489 = vpop.f32.mrf.mxu0
    %v1490 = vadd.f32 %v1470, %v1489
    %1491 = vdwg.mxu0
    %1492 = vst [vmem:[#allocation12] sm:$0xff] %v1490
    // Predicated region
    $region58: #{tpu_custom_call.1} parent=1 // pred_check
      _
    $region59: #{tpu_custom_call.1} parent=1 // pred_check_branch
      %1494 = sbr.rel (0) target = $region61
    $region60: #{tpu_custom_call.1} parent=1 // pred_region
      %1496 = vsyncadd [#allocation5], 0
      %s1498 = sshll.u32 [#allocation12], 4
      %s1499 = int_to_ptr.vmem [resolvable:$true] %s1498
      %s1500 = sshll.u32 %s9, 4
      %s1501 = int_to_ptr.hbm [resolvable:$true] %s1500
      %1503 = dma.vmem_to_hbm [thread:$0]  %s1499, 128, %s1501, [#allocation5]
    $region61: #{tpu_custom_call.1} parent=1 // pred_fallthru
      _
    // Predicated region
    $region62: #{tpu_custom_call.1} parent=1 // pred_check
      _
    $region63: #{tpu_custom_call.1} parent=1 // pred_check_branch
      %1505 = sbr.rel (0) target = $region65
    $region64: #{tpu_custom_call.1} parent=1 // pred_region
      %1507 = dma.done [#allocation5], 128
    $region65: #{tpu_custom_call.1} parent=1 // pred_fallthru
      _
    %1508 = vsyncpa [#allocation4], 1
    %1509 = vsyncpa [#allocation7], 1
    %1510 = vsyncpa [#allocation10], 1
    %1511 = vsyncpa [#allocation5], 1

</llo_original>
